<compile_context>
chip_gen: v7x
topology: tpu7x:2x2x1
jax: 0.10.0
libtpu: 0.0.40
codegen_flags: <defaults>
</compile_context>

<pallas_src>
import numpy as np
import jax
import jax.numpy as jnp
from jax.experimental import pallas as pl
from jax.experimental.pallas import tpu as pltpu


# ----------------------------------------------------------------------------
# Host glue: sigma estimation (numpy in the original torch code as well).
# ----------------------------------------------------------------------------
def calc_sigma(x1, x2):
    const = 8
    mat = np.concatenate((x1, x2))
    dist = []
    nsamp = mat.shape[0]
    for i in range(nsamp):
        euc_dist = np.sqrt(np.sum(np.square(np.subtract(mat[i, :], mat)), axis=1))
        dist.append(sorted(euc_dist)[1])
    sigma = np.square(const * np.median(dist))
    return float(sigma)


# ----------------------------------------------------------------------------
# Pallas kernel: whole forward pass at these (small) shapes fits in VMEM, so
# full-array blocks and a single grid point.
# ----------------------------------------------------------------------------
def _ma_kernel(k1_ref, k2_ref, a_ref, b_ref, ip_ref,   # VMEM (bf16/f32) inputs
               scal_ref,                               # SMEM packed scalars
               out_ref):                               # SMEM (3,) output
    k1b = k1_ref[...]          # bf16
    k2b = k2_ref[...]          # bf16
    ab = a_ref[...]            # bf16
    bb = b_ref[...]            # bf16
    ip = ip_ref[...]           # f32

    lam1 = scal_ref[0]
    lam2 = scal_ref[1]
    n_sigmas = scal_ref.shape[0] - 2

    # Projections onto the shared latent space (bf16 operands, f32 acc).
    x1 = jnp.dot(k1b, ab, preferred_element_type=jnp.float32)   # (n1, nfeat)
    x2 = jnp.dot(k2b, bb, preferred_element_type=jnp.float32)   # (n2, nfeat)
    x1b = x1.astype(jnp.bfloat16)
    x2b = x2.astype(jnp.bfloat16)
    # Use the quantized values for the squared norms too, so the Gram-trick
    # distance identity is internally consistent (d_ii ~ 0 exactly).
    x1f = x1b.astype(jnp.float32)
    x2f = x2b.astype(jnp.float32)

    # Gram matrices computed ONCE; reused for distances AND distortions.
    g11 = jnp.dot(x1b, x1b.T, preferred_element_type=jnp.float32)  # (n1, n1)
    g22 = jnp.dot(x2b, x2b.T, preferred_element_type=jnp.float32)  # (n2, n2)
    g12 = jnp.dot(x1b, x2b.T, preferred_element_type=jnp.float32)  # (n1, n2)

    r1 = jnp.sum(x1f * x1f, axis=1, keepdims=True)                 # (n1, 1)
    r2 = jnp.sum(x2f * x2f, axis=1, keepdims=True)                 # (n2, 1)

    # Pairwise squared distances (f32 subtraction), clamped at 0.
    d11 = jnp.maximum(r1 + r1.T - 2.0 * g11, 0.0)
    d22 = jnp.maximum(r2 + r2.T - 2.0 * g22, 0.0)
    d12 = jnp.maximum(r1 + r2.T - 2.0 * g12, 0.0)

    # mean over all entries of sum_s exp(-d / (2 sigma_s)).
    # Accumulate the elementwise sum across sigmas (EUP-heavy, VPU add),
    # then do a single full reduction and one 1/(n*m) multiply.
    def kernel_mean(d):
        inv_nm = 1.0 / float(d.shape[0] * d.shape[1])
        acc = jnp.zeros_like(d)
        for s in range(n_sigmas):                     # static, tiny trip count
            inv = 0.5 / scal_ref[2 + s]
            acc = acc + jnp.exp(-inv * d)
        return jnp.sum(acc) * inv_nm

    cost = kernel_mean(d11) + kernel_mean(d22) - 2.0 * kernel_mean(d12)
    out_ref[0] = jnp.maximum(cost, 0.0)               # torch clamps negative MMD

    # penalty = lambda1 * (||alpha^T K1 alpha - ip||_F + ||beta^T K2 beta - ip||_F)
    m1 = jnp.dot(ab.T, x1b, preferred_element_type=jnp.float32) - ip
    m2 = jnp.dot(bb.T, x2b, preferred_element_type=jnp.float32) - ip
    out_ref[1] = lam1 * (jnp.sqrt(jnp.sum(m1 * m1)) + jnp.sqrt(jnp.sum(m2 * m2)))

    # distortion = lambda2 * (||X1 X1^T - K1||_F + ||X2 X2^T - K2||_F)
    # Reuses g11/g22 — no extra matmuls; subtraction in f32.
    e1 = g11 - k1b.astype(jnp.float32)
    e2 = g22 - k2b.astype(jnp.float32)
    out_ref[2] = lam2 * (jnp.sqrt(jnp.sum(e1 * e1)) + jnp.sqrt(jnp.sum(e2 * e2)))


def _ma_pallas(k1, k2, alpha, beta, ip, sigmas, lambda1, lambda2):
    sigmas = jnp.asarray(sigmas, jnp.float32).reshape(-1)
    scal = jnp.concatenate(
        [jnp.asarray([lambda1, lambda2], jnp.float32), sigmas])

    n1, n2, nfeat = k1.shape[0], k2.shape[0], alpha.shape[1]
    # Rough live-set estimate (f32 intermediates + bf16 inputs) with headroom.
    est = 4 * (4 * n1 * n1 + 4 * n2 * n2 + 2 * n1 * n2
               + 8 * (n1 + n2) * nfeat + 4 * nfeat * nfeat)
    vmem_limit = int(min(max(2 * est, 32 << 20), 64 << 20))

    vmem = pl.BlockSpec(memory_space=pltpu.MemorySpace.VMEM)
    smem = pl.BlockSpec(memory_space=pltpu.MemorySpace.SMEM)

    out = pl.pallas_call(
        _ma_kernel,
        out_shape=jax.ShapeDtypeStruct((3,), jnp.float32),
        in_specs=[vmem, vmem, vmem, vmem, vmem, smem],
        out_specs=smem,
        compiler_params=pltpu.CompilerParams(vmem_limit_bytes=vmem_limit),
    )(k1.astype(jnp.bfloat16), k2.astype(jnp.bfloat16),
      alpha.astype(jnp.bfloat16), beta.astype(jnp.bfloat16),
      ip.astype(jnp.float32), scal)
    return out[0], out[1], out[2]


# ----------------------------------------------------------------------------
# Module equivalent
# ----------------------------------------------------------------------------
class ManifoldAlignment:
    """JAX/Pallas equivalent of the torch `manifold_alignment` module."""

    def __init__(self, nfeat, num_k1, num_k2, seed):
        key = jax.random.PRNGKey(seed)
        ka, kb = jax.random.split(key)
        # torch: uniform_(0.0, 0.1)
        self.alpha = jax.random.uniform(ka, (num_k1, nfeat), jnp.float32, 0.0, 0.1)
        self.beta = jax.random.uniform(kb, (num_k2, nfeat), jnp.float32, 0.0, 0.1)

    def forward(self, k1, k2, ip, sigmas, lambda1, lambda2):
        if isinstance(sigmas, (int, float)) and sigmas == 0:
            # host-side sigma estimation (numpy in the original code too)
            x1 = np.asarray(jnp.matmul(k1, self.alpha))
            x2 = np.asarray(jnp.matmul(k2, self.beta))
            sigmas = jnp.asarray([calc_sigma(x1, x2)], jnp.float32)
        mmd, penalty, distortion = _ma_pallas(
            k1, k2, self.alpha, self.beta, ip, sigmas, lambda1, lambda2)
        return mmd, penalty, distortion, sigmas


# ----------------------------------------------------------------------------
# Pure-JAX (f32) reference for a correctness check.
# ----------------------------------------------------------------------------
def _reference(k1, k2, alpha, beta, ip, sigmas, lambda1, lambda2):
    x1 = k1 @ alpha
    x2 = k2 @ beta

    def sqdist(x, y):
        return jnp.sum((x[:, :, None] - y.T[None, :, :]) ** 2, axis=1)

    def kmean(x, y):
        d = sqdist(x, y)
        invs = 1.0 / (2.0 * sigmas)
        return jnp.mean(jnp.sum(jnp.exp(-invs[:, None] * d.reshape(1, -1)), axis=0))

    cost = kmean(x1, x1) + kmean(x2, x2) - 2.0 * kmean(x1, x2)
    cost = jnp.maximum(cost, 0.0)
    fro = lambda m: jnp.sqrt(jnp.sum(m * m))
    pen = lambda1 * (fro(alpha.T @ (k1 @ alpha) - ip) + fro(beta.T @ (k2 @ beta) - ip))
    dist = lambda2 * (fro((k1 @ alpha) @ (alpha.T @ k1.T) - k1) +
                      fro((k2 @ beta) @ (beta.T @ k2.T) - k2))
    return cost, pen, dist


if __name__ == "__main__":
    n1, n2, nfeat = 64, 48, 16          # num_k1, num_k2, latent dim
    key = jax.random.PRNGKey(0)
    kk1, kk2 = jax.random.split(key)

    # symmetric PSD "kernel" matrices (semantics only need square matrices)
    g1 = jax.random.normal(kk1, (n1, n1), jnp.float32)
    g2 = jax.random.normal(kk2, (n2, n2), jnp.float32)
    k1 = (g1 @ g1.T) / n1
    k2 = (g2 @ g2.T) / n2
    ip = jnp.eye(nfeat, dtype=jnp.float32)
    sigmas = jnp.asarray([1.0, 4.0], jnp.float32)
    lambda1, lambda2 = 0.5, 0.25

    model = ManifoldAlignment(nfeat, n1, n2, seed=42)
    mmd, penalty, distortion, sig_out = model.forward(k1, k2, ip, sigmas,
                                                      lambda1, lambda2)
    jax.block_until_ready((mmd, penalty, distortion, sig_out))

    # correctness check vs plain-JAX f32 reference.
    # Kernel feeds the MXU bf16 operands (f32 accumulation), so tolerances are
    # set for bf16-grade inputs; the MMD is a difference of near-equal means,
    # hence the extra atol.
    r_mmd, r_pen, r_dist = _reference(k1, k2, model.alpha, model.beta, ip,
                                      sigmas, lambda1, lambda2)
    np.testing.assert_allclose(np.asarray(mmd), np.asarray(r_mmd),
                               rtol=5e-2, atol=5e-3)
    np.testing.assert_allclose(np.asarray(penalty), np.asarray(r_pen),
                               rtol=2e-2, atol=1e-4)
    np.testing.assert_allclose(np.asarray(distortion), np.asarray(r_dist),
                               rtol=2e-2, atol=1e-4)

    print("KERNEL_OK")
</pallas_src>

<mosaic_0001>
module attributes {stable_mosaic.version = 11 : i64} {
  func.func @_ma_kernel(%arg0: memref<64x64xbf16, #tpu.memory_space<vmem>>, %arg1: memref<48x48xbf16, #tpu.memory_space<vmem>>, %arg2: memref<64x16xbf16, #tpu.memory_space<vmem>>, %arg3: memref<48x16xbf16, #tpu.memory_space<vmem>>, %arg4: memref<16x16xf32, #tpu.memory_space<vmem>>, %arg5: memref<4xf32, #tpu.memory_space<smem>>, %arg6: memref<3xf32, #tpu.memory_space<smem>>) attributes {dimension_semantics = [], scalar_prefetch = 0 : i64, scratch_operands = 0 : i64, tpu.core_type = #tpu.core_type<tc>} {
    %c0 = arith.constant 0 : index
    %c0_0 = arith.constant 0 : index
    %0 = vector.load %arg0[%c0, %c0_0] : memref<64x64xbf16, #tpu.memory_space<vmem>>, vector<64x64xbf16>
    %c0_1 = arith.constant 0 : index
    %c0_2 = arith.constant 0 : index
    %1 = vector.load %arg1[%c0_1, %c0_2] : memref<48x48xbf16, #tpu.memory_space<vmem>>, vector<48x48xbf16>
    %c0_3 = arith.constant 0 : index
    %c0_4 = arith.constant 0 : index
    %2 = vector.load %arg2[%c0_3, %c0_4] : memref<64x16xbf16, #tpu.memory_space<vmem>>, vector<64x16xbf16>
    %c0_5 = arith.constant 0 : index
    %c0_6 = arith.constant 0 : index
    %3 = vector.load %arg3[%c0_5, %c0_6] : memref<48x16xbf16, #tpu.memory_space<vmem>>, vector<48x16xbf16>
    %c0_7 = arith.constant 0 : index
    %c0_8 = arith.constant 0 : index
    %4 = vector.load %arg4[%c0_7, %c0_8] : memref<16x16xf32, #tpu.memory_space<vmem>>, vector<16x16xf32>
    %c0_9 = arith.constant 0 : index
    %5 = memref.load %arg5[%c0_9] : memref<4xf32, #tpu.memory_space<smem>>
    %c1 = arith.constant 1 : index
    %6 = memref.load %arg5[%c1] : memref<4xf32, #tpu.memory_space<smem>>
    %cst = arith.constant dense<0.000000e+00> : vector<64x16xf32>
    %7 = tpu.matmul %0, %2, %cst {dimension_numbers = #tpu.dot_dimension_numbers<[1], [0], [0], [1], [0, 0, 1, 1], [], []>} : vector<64x64xbf16>, vector<64x16xbf16>, vector<64x16xf32> -> vector<64x16xf32>
    %cst_10 = arith.constant dense<0.000000e+00> : vector<48x16xf32>
    %8 = tpu.matmul %1, %3, %cst_10 {dimension_numbers = #tpu.dot_dimension_numbers<[1], [0], [0], [1], [0, 0, 1, 1], [], []>} : vector<48x48xbf16>, vector<48x16xbf16>, vector<48x16xf32> -> vector<48x16xf32>
    %9 = arith.truncf %7 : vector<64x16xf32> to vector<64x16xbf16>
    %10 = arith.truncf %8 : vector<48x16xf32> to vector<48x16xbf16>
    %11 = arith.extf %9 : vector<64x16xbf16> to vector<64x16xf32>
    %12 = arith.extf %10 : vector<48x16xbf16> to vector<48x16xf32>
    %13 = tpu.transpose %9, [1, 0] : vector<64x16xbf16> -> vector<16x64xbf16>
    %cst_11 = arith.constant dense<0.000000e+00> : vector<64x64xf32>
    %14 = tpu.matmul %9, %13, %cst_11 {dimension_numbers = #tpu.dot_dimension_numbers<[1], [0], [0], [1], [0, 0, 1, 1], [], []>} : vector<64x16xbf16>, vector<16x64xbf16>, vector<64x64xf32> -> vector<64x64xf32>
    %15 = tpu.transpose %10, [1, 0] : vector<48x16xbf16> -> vector<16x48xbf16>
    %cst_12 = arith.constant dense<0.000000e+00> : vector<48x48xf32>
    %16 = tpu.matmul %10, %15, %cst_12 {dimension_numbers = #tpu.dot_dimension_numbers<[1], [0], [0], [1], [0, 0, 1, 1], [], []>} : vector<48x16xbf16>, vector<16x48xbf16>, vector<48x48xf32> -> vector<48x48xf32>
    %17 = tpu.transpose %10, [1, 0] : vector<48x16xbf16> -> vector<16x48xbf16>
    %cst_13 = arith.constant dense<0.000000e+00> : vector<64x48xf32>
    %18 = tpu.matmul %9, %17, %cst_13 {dimension_numbers = #tpu.dot_dimension_numbers<[1], [0], [0], [1], [0, 0, 1, 1], [], []>} : vector<64x16xbf16>, vector<16x48xbf16>, vector<64x48xf32> -> vector<64x48xf32>
    %19 = arith.mulf %11, %11 : vector<64x16xf32>
    %cst_14 = arith.constant dense<0.000000e+00> : vector<64xf32>
    %20 = vector.multi_reduction <add>, %19, %cst_14 [1] : vector<64x16xf32> to vector<64xf32>
    %21 = vector.shape_cast %20 : vector<64xf32> to vector<64x1xf32>
    %22 = arith.mulf %12, %12 : vector<48x16xf32>
    %cst_15 = arith.constant dense<0.000000e+00> : vector<48xf32>
    %23 = vector.multi_reduction <add>, %22, %cst_15 [1] : vector<48x16xf32> to vector<48xf32>
    %24 = vector.shape_cast %23 : vector<48xf32> to vector<48x1xf32>
    %25 = tpu.transpose %21, [1, 0] : vector<64x1xf32> -> vector<1x64xf32>
    %26 = vector.broadcast %21 : vector<64x1xf32> to vector<64x64xf32>
    %27 = vector.broadcast %25 : vector<1x64xf32> to vector<64x64xf32>
    %28 = arith.addf %26, %27 : vector<64x64xf32>
    %cst_16 = arith.constant 2.000000e+00 : f32
    %29 = vector.broadcast %cst_16 : f32 to vector<64x64xf32>
    %30 = arith.mulf %29, %14 : vector<64x64xf32>
    %31 = arith.subf %28, %30 : vector<64x64xf32>
    %cst_17 = arith.constant 0.000000e+00 : f32
    %32 = vector.broadcast %cst_17 : f32 to vector<64x64xf32>
    %33 = arith.maximumf %31, %32 : vector<64x64xf32>
    %34 = tpu.transpose %24, [1, 0] : vector<48x1xf32> -> vector<1x48xf32>
    %35 = vector.broadcast %24 : vector<48x1xf32> to vector<48x48xf32>
    %36 = vector.broadcast %34 : vector<1x48xf32> to vector<48x48xf32>
    %37 = arith.addf %35, %36 : vector<48x48xf32>
    %cst_18 = arith.constant 2.000000e+00 : f32
    %38 = vector.broadcast %cst_18 : f32 to vector<48x48xf32>
    %39 = arith.mulf %38, %16 : vector<48x48xf32>
    %40 = arith.subf %37, %39 : vector<48x48xf32>
    %cst_19 = arith.constant 0.000000e+00 : f32
    %41 = vector.broadcast %cst_19 : f32 to vector<48x48xf32>
    %42 = arith.maximumf %40, %41 : vector<48x48xf32>
    %43 = tpu.transpose %24, [1, 0] : vector<48x1xf32> -> vector<1x48xf32>
    %44 = vector.broadcast %21 : vector<64x1xf32> to vector<64x48xf32>
    %45 = vector.broadcast %43 : vector<1x48xf32> to vector<64x48xf32>
    %46 = arith.addf %44, %45 : vector<64x48xf32>
    %cst_20 = arith.constant 2.000000e+00 : f32
    %47 = vector.broadcast %cst_20 : f32 to vector<64x48xf32>
    %48 = arith.mulf %47, %18 : vector<64x48xf32>
    %49 = arith.subf %46, %48 : vector<64x48xf32>
    %cst_21 = arith.constant 0.000000e+00 : f32
    %50 = vector.broadcast %cst_21 : f32 to vector<64x48xf32>
    %51 = arith.maximumf %49, %50 : vector<64x48xf32>
    %cst_22 = arith.constant 0.000000e+00 : f32
    %52 = vector.broadcast %cst_22 : f32 to vector<64x64xf32>
    %c2 = arith.constant 2 : index
    %53 = memref.load %arg5[%c2] : memref<4xf32, #tpu.memory_space<smem>>
    %cst_23 = arith.constant 5.000000e-01 : f32
    %54 = arith.divf %cst_23, %53 : f32
    %cst_24 = arith.constant 0.000000e+00 : f32
    %55 = arith.subf %cst_24, %54 : f32
    %56 = vector.broadcast %55 : f32 to vector<64x64xf32>
    %57 = arith.mulf %56, %33 : vector<64x64xf32>
    %58 = math.exp %57 : vector<64x64xf32>
    %59 = arith.addf %52, %58 : vector<64x64xf32>
    %c3 = arith.constant 3 : index
    %60 = memref.load %arg5[%c3] : memref<4xf32, #tpu.memory_space<smem>>
    %cst_25 = arith.constant 5.000000e-01 : f32
    %61 = arith.divf %cst_25, %60 : f32
    %cst_26 = arith.constant 0.000000e+00 : f32
    %62 = arith.subf %cst_26, %61 : f32
    %63 = vector.broadcast %62 : f32 to vector<64x64xf32>
    %64 = arith.mulf %63, %33 : vector<64x64xf32>
    %65 = math.exp %64 : vector<64x64xf32>
    %66 = arith.addf %59, %65 : vector<64x64xf32>
    %67 = vector.shape_cast %66 : vector<64x64xf32> to vector<1x64x64xf32>
    %cst_27 = arith.constant dense<0.000000e+00> : vector<1xf32>
    %68 = vector.multi_reduction <add>, %67, %cst_27 [1, 2] : vector<1x64x64xf32> to vector<1xf32>
    %69 = vector.shape_cast %68 : vector<1xf32> to vector<1x1x1xf32>
    %70 = vector.extract %69[0, 0, 0] : f32 from vector<1x1x1xf32>
    %cst_28 = arith.constant 2.44140625E-4 : f32
    %71 = arith.mulf %70, %cst_28 : f32
    %cst_29 = arith.constant 0.000000e+00 : f32
    %72 = vector.broadcast %cst_29 : f32 to vector<48x48xf32>
    %c2_30 = arith.constant 2 : index
    %73 = memref.load %arg5[%c2_30] : memref<4xf32, #tpu.memory_space<smem>>
    %cst_31 = arith.constant 5.000000e-01 : f32
    %74 = arith.divf %cst_31, %73 : f32
    %cst_32 = arith.constant 0.000000e+00 : f32
    %75 = arith.subf %cst_32, %74 : f32
    %76 = vector.broadcast %75 : f32 to vector<48x48xf32>
    %77 = arith.mulf %76, %42 : vector<48x48xf32>
    %78 = math.exp %77 : vector<48x48xf32>
    %79 = arith.addf %72, %78 : vector<48x48xf32>
    %c3_33 = arith.constant 3 : index
    %80 = memref.load %arg5[%c3_33] : memref<4xf32, #tpu.memory_space<smem>>
    %cst_34 = arith.constant 5.000000e-01 : f32
    %81 = arith.divf %cst_34, %80 : f32
    %cst_35 = arith.constant 0.000000e+00 : f32
    %82 = arith.subf %cst_35, %81 : f32
    %83 = vector.broadcast %82 : f32 to vector<48x48xf32>
    %84 = arith.mulf %83, %42 : vector<48x48xf32>
    %85 = math.exp %84 : vector<48x48xf32>
    %86 = arith.addf %79, %85 : vector<48x48xf32>
    %87 = vector.shape_cast %86 : vector<48x48xf32> to vector<1x48x48xf32>
    %cst_36 = arith.constant dense<0.000000e+00> : vector<1xf32>
    %88 = vector.multi_reduction <add>, %87, %cst_36 [1, 2] : vector<1x48x48xf32> to vector<1xf32>
    %89 = vector.shape_cast %88 : vector<1xf32> to vector<1x1x1xf32>
    %90 = vector.extract %89[0, 0, 0] : f32 from vector<1x1x1xf32>
    %cst_37 = arith.constant 4.34027781E-4 : f32
    %91 = arith.mulf %90, %cst_37 : f32
    %92 = arith.addf %71, %91 : f32
    %cst_38 = arith.constant 0.000000e+00 : f32
    %93 = vector.broadcast %cst_38 : f32 to vector<64x48xf32>
    %c2_39 = arith.constant 2 : index
    %94 = memref.load %arg5[%c2_39] : memref<4xf32, #tpu.memory_space<smem>>
    %cst_40 = arith.constant 5.000000e-01 : f32
    %95 = arith.divf %cst_40, %94 : f32
    %cst_41 = arith.constant 0.000000e+00 : f32
    %96 = arith.subf %cst_41, %95 : f32
    %97 = vector.broadcast %96 : f32 to vector<64x48xf32>
    %98 = arith.mulf %97, %51 : vector<64x48xf32>
    %99 = math.exp %98 : vector<64x48xf32>
    %100 = arith.addf %93, %99 : vector<64x48xf32>
    %c3_42 = arith.constant 3 : index
    %101 = memref.load %arg5[%c3_42] : memref<4xf32, #tpu.memory_space<smem>>
    %cst_43 = arith.constant 5.000000e-01 : f32
    %102 = arith.divf %cst_43, %101 : f32
    %cst_44 = arith.constant 0.000000e+00 : f32
    %103 = arith.subf %cst_44, %102 : f32
    %104 = vector.broadcast %103 : f32 to vector<64x48xf32>
    %105 = arith.mulf %104, %51 : vector<64x48xf32>
    %106 = math.exp %105 : vector<64x48xf32>
    %107 = arith.addf %100, %106 : vector<64x48xf32>
    %108 = vector.shape_cast %107 : vector<64x48xf32> to vector<1x64x48xf32>
    %cst_45 = arith.constant dense<0.000000e+00> : vector<1xf32>
    %109 = vector.multi_reduction <add>, %108, %cst_45 [1, 2] : vector<1x64x48xf32> to vector<1xf32>
    %110 = vector.shape_cast %109 : vector<1xf32> to vector<1x1x1xf32>
    %111 = vector.extract %110[0, 0, 0] : f32 from vector<1x1x1xf32>
    %cst_46 = arith.constant 3.25520843E-4 : f32
    %112 = arith.mulf %111, %cst_46 : f32
    %cst_47 = arith.constant 2.000000e+00 : f32
    %113 = arith.mulf %cst_47, %112 : f32
    %114 = arith.subf %92, %113 : f32
    %cst_48 = arith.constant 0.000000e+00 : f32
    %115 = arith.maximumf %114, %cst_48 : f32
    %c0_49 = arith.constant 0 : index
    %116 = memref.load %arg6[%c0_49] : memref<3xf32, #tpu.memory_space<smem>>
    memref.store %115, %arg6[%c0_49] : memref<3xf32, #tpu.memory_space<smem>>
    %117 = tpu.transpose %2, [1, 0] : vector<64x16xbf16> -> vector<16x64xbf16>
    %cst_50 = arith.constant dense<0.000000e+00> : vector<16x16xf32>
    %118 = tpu.matmul %117, %9, %cst_50 {dimension_numbers = #tpu.dot_dimension_numbers<[1], [0], [0], [1], [0, 0, 1, 1], [], []>} : vector<16x64xbf16>, vector<64x16xbf16>, vector<16x16xf32> -> vector<16x16xf32>
    %119 = arith.subf %118, %4 : vector<16x16xf32>
    %120 = tpu.transpose %3, [1, 0] : vector<48x16xbf16> -> vector<16x48xbf16>
    %cst_51 = arith.constant dense<0.000000e+00> : vector<16x16xf32>
    %121 = tpu.matmul %120, %10, %cst_51 {dimension_numbers = #tpu.dot_dimension_numbers<[1], [0], [0], [1], [0, 0, 1, 1], [], []>} : vector<16x48xbf16>, vector<48x16xbf16>, vector<16x16xf32> -> vector<16x16xf32>
    %122 = arith.subf %121, %4 : vector<16x16xf32>
    %123 = arith.mulf %119, %119 : vector<16x16xf32>
    %124 = vector.shape_cast %123 : vector<16x16xf32> to vector<1x16x16xf32>
    %cst_52 = arith.constant dense<0.000000e+00> : vector<1xf32>
    %125 = vector.multi_reduction <add>, %124, %cst_52 [1, 2] : vector<1x16x16xf32> to vector<1xf32>
    %126 = vector.shape_cast %125 : vector<1xf32> to vector<1x1x1xf32>
    %127 = vector.extract %126[0, 0, 0] : f32 from vector<1x1x1xf32>
    %128 = math.sqrt %127 : f32
    %129 = arith.mulf %122, %122 : vector<16x16xf32>
    %130 = vector.shape_cast %129 : vector<16x16xf32> to vector<1x16x16xf32>
    %cst_53 = arith.constant dense<0.000000e+00> : vector<1xf32>
    %131 = vector.multi_reduction <add>, %130, %cst_53 [1, 2] : vector<1x16x16xf32> to vector<1xf32>
    %132 = vector.shape_cast %131 : vector<1xf32> to vector<1x1x1xf32>
    %133 = vector.extract %132[0, 0, 0] : f32 from vector<1x1x1xf32>
    %134 = math.sqrt %133 : f32
    %135 = arith.addf %128, %134 : f32
    %136 = arith.mulf %5, %135 : f32
    %c1_54 = arith.constant 1 : index
    %137 = memref.load %arg6[%c1_54] : memref<3xf32, #tpu.memory_space<smem>>
    memref.store %136, %arg6[%c1_54] : memref<3xf32, #tpu.memory_space<smem>>
    %138 = arith.extf %0 : vector<64x64xbf16> to vector<64x64xf32>
    %139 = arith.subf %14, %138 : vector<64x64xf32>
    %140 = arith.extf %1 : vector<48x48xbf16> to vector<48x48xf32>
    %141 = arith.subf %16, %140 : vector<48x48xf32>
    %142 = arith.mulf %139, %139 : vector<64x64xf32>
    %143 = vector.shape_cast %142 : vector<64x64xf32> to vector<1x64x64xf32>
    %cst_55 = arith.constant dense<0.000000e+00> : vector<1xf32>
    %144 = vector.multi_reduction <add>, %143, %cst_55 [1, 2] : vector<1x64x64xf32> to vector<1xf32>
    %145 = vector.shape_cast %144 : vector<1xf32> to vector<1x1x1xf32>
    %146 = vector.extract %145[0, 0, 0] : f32 from vector<1x1x1xf32>
    %147 = math.sqrt %146 : f32
    %148 = arith.mulf %141, %141 : vector<48x48xf32>
    %149 = vector.shape_cast %148 : vector<48x48xf32> to vector<1x48x48xf32>
    %cst_56 = arith.constant dense<0.000000e+00> : vector<1xf32>
    %150 = vector.multi_reduction <add>, %149, %cst_56 [1, 2] : vector<1x48x48xf32> to vector<1xf32>
    %151 = vector.shape_cast %150 : vector<1xf32> to vector<1x1x1xf32>
    %152 = vector.extract %151[0, 0, 0] : f32 from vector<1x1x1xf32>
    %153 = math.sqrt %152 : f32
    %154 = arith.addf %147, %153 : f32
    %155 = arith.mulf %6, %154 : f32
    %c2_57 = arith.constant 2 : index
    %156 = memref.load %arg6[%c2_57] : memref<3xf32, #tpu.memory_space<smem>>
    memref.store %155, %arg6[%c2_57] : memref<3xf32, #tpu.memory_space<smem>>
    return
  }
}

</mosaic_0001>

<llo_original>
// kernel: tpu_custom_call.1
$region0: #{tpu_custom_call.1}
  #allocation0 [shape = 'u32[]', space=smem, size = 0x4, offset = 0x4, fixed_abs, tag = 'smem constant byte address 0x4 - core index']
  #allocation1 [shape = 'u32[144,128]{1,0:T(1,128)}', space=vmem, size = 0x12000, scoped, tag = 'internal scratch']
  %s0 = inlined_call_operand.vmem [shape: bf16[64,64], index: 0, kind: input, shape index: {}]
  %s1 = inlined_call_operand.vmem [shape: bf16[48,48], index: 1, kind: input, shape index: {}]
  %s2 = inlined_call_operand.vmem [shape: bf16[64,16], index: 2, kind: input, shape index: {}]
  %s3 = inlined_call_operand.vmem [shape: bf16[48,16], index: 3, kind: input, shape index: {}]
  %s4 = inlined_call_operand.vmem [shape: f32[16,16], index: 4, kind: input, shape index: {}]
  %s5 = inlined_call_operand.vmem [shape: f32[4], index: 5, kind: input, shape index: {}]
  %s6 = inlined_call_operand.hbm [shape: f32[3], index: 6, kind: output, shape index: {}]
  %s7 = sld [smem:[#allocation0]]
  $region38: #{tpu_custom_call.1} parent=0
    _
  %s9 = ssub.s32 1, %s7
  %s10 = scalar_select 0, %s9, %s7
  $region1: #{tpu_custom_call.1} parent=0
    #allocation2 [shape = 'u8[512]{0}', space=smem, size = 0x200, scoped, tag = 'input window, operand 5, single buffered']
    #allocation3 [shape = 's32[1]{0}', space=sflag, size = 0x4, scoped, tag = 'scoped memory for tpu_custom_call.1']
    #allocation4 [shape = 's32[1]{0}', space=sflag, size = 0x4, scoped, tag = 'scoped memory for tpu_custom_call.1']
    #allocation5 [shape = 'u8[512]{0}', space=smem, size = 0x200, scoped, tag = 'output window, operand 0, single buffered']
    %11 = vsyncpa [#allocation4], 0
    %12 = vsyncpa [#allocation3], 0
    // Predicated region
    $region2: #{tpu_custom_call.1} parent=1 // pred_check
      _
    $region3: #{tpu_custom_call.1} parent=1 // pred_check_branch
      %14 = sbr.rel (0) target = $region5
    $region4: #{tpu_custom_call.1} parent=1 // pred_region
      _
    $region5: #{tpu_custom_call.1} parent=1 // pred_fallthru
      _
    // Predicated region
    $region6: #{tpu_custom_call.1} parent=1 // pred_check
      _
    $region7: #{tpu_custom_call.1} parent=1 // pred_check_branch
      %16 = sbr.rel (0) target = $region9
    $region8: #{tpu_custom_call.1} parent=1 // pred_region
      _
    $region9: #{tpu_custom_call.1} parent=1 // pred_fallthru
      _
    // Predicated region
    $region10: #{tpu_custom_call.1} parent=1 // pred_check
      _
    $region11: #{tpu_custom_call.1} parent=1 // pred_check_branch
      %18 = sbr.rel (0) target = $region13
    $region12: #{tpu_custom_call.1} parent=1 // pred_region
      _
    $region13: #{tpu_custom_call.1} parent=1 // pred_fallthru
      _
    // Predicated region
    $region14: #{tpu_custom_call.1} parent=1 // pred_check
      _
    $region15: #{tpu_custom_call.1} parent=1 // pred_check_branch
      %20 = sbr.rel (0) target = $region17
    $region16: #{tpu_custom_call.1} parent=1 // pred_region
      _
    $region17: #{tpu_custom_call.1} parent=1 // pred_fallthru
      _
    // Predicated region
    $region18: #{tpu_custom_call.1} parent=1 // pred_check
      _
    $region19: #{tpu_custom_call.1} parent=1 // pred_check_branch
      %22 = sbr.rel (0) target = $region21
    $region20: #{tpu_custom_call.1} parent=1 // pred_region
      _
    $region21: #{tpu_custom_call.1} parent=1 // pred_fallthru
      _
    // Predicated region
    $region22: #{tpu_custom_call.1} parent=1 // pred_check
      _
    $region23: #{tpu_custom_call.1} parent=1 // pred_check_branch
      %24 = sbr.rel (0) target = $region25
    $region24: #{tpu_custom_call.1} parent=1 // pred_region
      %s26 = ssub.s32 16, 16
      %27 = vsyncadd [#allocation4], %s26
      %s29 = sshll.u32 %s5, 4
      %s30 = int_to_ptr.vmem [resolvable:$true] %s29
      %32 = dma.vmem_to_smem %s30, 16, [#allocation2], [#allocation4]
    $region25: #{tpu_custom_call.1} parent=1 // pred_fallthru
      _
    // Predicated region
    $region26: #{tpu_custom_call.1} parent=1 // pred_check
      _
    $region27: #{tpu_custom_call.1} parent=1 // pred_check_branch
      %34 = sbr.rel (0) target = $region29
    $region28: #{tpu_custom_call.1} parent=1 // pred_region
      %35 = dma.done [#allocation4], 16
    $region29: #{tpu_custom_call.1} parent=1 // pred_fallthru
      _
    %36 = sfence
    %v38 = vld [vmem:[%s0] sm:$0xf]
    %v39 = vld [vmem:[%s0 + $0x4] sm:$0xf]
    %v40 = vld [vmem:[%s0 + $0x8] sm:$0xf]
    %v41 = vld [vmem:[%s0 + $0xc] sm:$0xf]
    %v42 = vld [vmem:[%s0 + $0x10] sm:$0xf]
    %v43 = vld [vmem:[%s0 + $0x14] sm:$0xf]
    %v44 = vld [vmem:[%s0 + $0x18] sm:$0xf]
    %v45 = vld [vmem:[%s0 + $0x1c] sm:$0xf]
    %v46 = vld [vmem:[%s1] sm:$0xf]
    %v47 = vld [vmem:[%s1 + $0x4] sm:$0xf]
    %v48 = vld [vmem:[%s1 + $0x8] sm:$0xf]
    %v49 = vld [vmem:[%s1 + $0xc] sm:$0xf]
    %v50 = vld [vmem:[%s1 + $0x10] sm:$0xf]
    %v51 = vld [vmem:[%s1 + $0x14] sm:$0xf]
    %v52 = vld [vmem:[%s2] sm:$0xf]
    %v53 = vld [vmem:[%s2 + $0x4] sm:$0xf]
    %v54 = vld [vmem:[%s2 + $0x8] sm:$0xf]
    %v55 = vld [vmem:[%s2 + $0xc] sm:$0xf]
    %v56 = vld [vmem:[%s2 + $0x10] sm:$0xf]
    %v57 = vld [vmem:[%s2 + $0x14] sm:$0xf]
    %v58 = vld [vmem:[%s2 + $0x18] sm:$0xf]
    %v59 = vld [vmem:[%s2 + $0x1c] sm:$0xf]
    %v60 = vld [vmem:[%s3] sm:$0xf]
    %v61 = vld [vmem:[%s3 + $0x4] sm:$0xf]
    %v62 = vld [vmem:[%s3 + $0x8] sm:$0xf]
    %v63 = vld [vmem:[%s3 + $0xc] sm:$0xf]
    %v64 = vld [vmem:[%s3 + $0x10] sm:$0xf]
    %v65 = vld [vmem:[%s3 + $0x14] sm:$0xf]
    %v66 = vld [vmem:[%s4] sm:$0xff]
    %v67 = vld [vmem:[%s4 + $0x8] sm:$0xff]
    %s68 = sld [smem:[#allocation2]]
    %s69 = sld [smem:[#allocation2 + $0x1]]
    %v78 = vunpack.c.l.b16 %v38
    %v79 = vunpack.c.l.b16 %v39
    %v80 = vunpack.c.l.b16 %v40
    %v81 = vunpack.c.l.b16 %v41
    %v82 = vunpack.c.l.b16 %v42
    %v83 = vunpack.c.l.b16 %v43
    %v84 = vunpack.c.l.b16 %v44
    %v85 = vunpack.c.l.b16 %v45
    %v86 = vpack.c.b16 %v79, %v78
    %v87 = vpack.c.b16 %v81, %v80
    %v88 = vpack.c.b16 %v83, %v82
    %v89 = vpack.c.b16 %v85, %v84
    %v98 = vunpack.c.l.b16 %v52
    %v99 = vunpack.c.l.b16 %v53
    %v100 = vunpack.c.l.b16 %v54
    %v101 = vunpack.c.l.b16 %v55
    %v102 = vunpack.c.l.b16 %v56
    %v103 = vunpack.c.l.b16 %v57
    %v104 = vunpack.c.l.b16 %v58
    %v105 = vunpack.c.l.b16 %v59
    %v106 = vpack.c.b16 %v99, %v98
    %v107 = vpack.c.b16 %v101, %v100
    %v108 = vpack.c.b16 %v103, %v102
    %v109 = vpack.c.b16 %v105, %v104
    %vm114 = vcmask 523264
    %v116 = vsel %vm114, %v86, 0
    %v119 = vsel %vm114, %v87, 0
    %v122 = vsel %vm114, %v88, 0
    %v125 = vsel %vm114, %v89, 0
    %127 = vmatprep.subr.bf16.mxu0 0
    %128 = vmatpush1.bf16.msra.mxu0 %v106
    %129 = vmatprep.subr.bf16.mxu0 0
    %130 = vmatpush1.bf16.msra.mxu0 %v107
    %131 = vmatprep.subr.bf16.mxu0 0
    %132 = vmatpush1.bf16.msra.mxu0 %v108
    %133 = vmatprep.subr.bf16.mxu0 0
    %134 = vmatpush1.bf16.msra.mxu0 %v109
    %135 = vmatprep.subr.bf16.mxu0 0
    %136 = vmatpush1.bf16.msra.mxu0 0
    %137 = vmatprep.subr.bf16.mxu0 0
    %138 = vmatpush1.bf16.msra.mxu0 0
    %139 = vmatprep.subr.bf16.mxu0 0
    %140 = vmatpush1.bf16.msra.mxu0 0
    %141 = vmatprep.subr.bf16.mxu0 0
    %142 = vmatpush1.bf16.msra.mxu0 0
    %143 = vmatprep.subr.bf16.mxu0 0
    %144 = vmatpush1.bf16.msra.mxu0 0
    %145 = vmatprep.subr.bf16.mxu0 0
    %146 = vmatpush1.bf16.msra.mxu0 0
    %147 = vmatprep.subr.bf16.mxu0 0
    %148 = vmatpush1.bf16.msra.mxu0 0
    %149 = vmatprep.subr.bf16.mxu0 0
    %150 = vmatpush1.bf16.msra.mxu0 0
    %151 = vmatprep.subr.bf16.mxu0 0
    %152 = vmatpush1.bf16.msra.mxu0 0
    %153 = vmatprep.subr.bf16.mxu0 0
    %154 = vmatpush1.bf16.msra.mxu0 0
    %155 = vmatprep.subr.bf16.mxu0 0
    %156 = vmatpush1.bf16.msra.mxu0 0
    %157 = vmatprep.subr.bf16.mxu0 0
    %158 = vmatpush1.bf16.msra.mxu0 0
    %159 = vmatprep.mubr.bf16.mxu0 0
    %160 = vmatmul.mubr.bf16.gmra.mrb[0].mxu0 %v116
    %v161 = vpop.f32.mrb[0].mxu0
    %v162 = vadd.f32 0.0, %v161
    %v163 = vpop.f32.mrb[0].mxu0
    %v164 = vpop.f32.mrb[0].mxu0
    %v165 = vadd.f32 0.0, %v164
    %v166 = vpop.f32.mrb[0].mxu0
    %167 = vmatprep.mubr.bf16.mxu0 0
    %168 = vmatmul.mubr.bf16.gmra.mrb[0].mxu0 %v119
    %v169 = vpop.f32.mrb[0].mxu0
    %v170 = vadd.f32 0.0, %v169
    %v171 = vpop.f32.mrb[0].mxu0
    %v172 = vpop.f32.mrb[0].mxu0
    %v173 = vadd.f32 0.0, %v172
    %v174 = vpop.f32.mrb[0].mxu0
    %175 = vmatprep.mubr.bf16.mxu0 0
    %176 = vmatmul.mubr.bf16.gmra.mrb[0].mxu0 %v122
    %v177 = vpop.f32.mrb[0].mxu0
    %v178 = vadd.f32 0.0, %v177
    %v179 = vpop.f32.mrb[0].mxu0
    %v180 = vpop.f32.mrb[0].mxu0
    %v181 = vadd.f32 0.0, %v180
    %v182 = vpop.f32.mrb[0].mxu0
    %183 = vmatprep.mubr.bf16.mxu0 0
    %184 = vmatmul.mubr.bf16.gmra.mrb[0].mxu0 %v125
    %v185 = vpop.f32.mrb[0].mxu0
    %v186 = vadd.f32 0.0, %v185
    %v187 = vpop.f32.mrb[0].mxu0
    %v188 = vpop.f32.mrb[0].mxu0
    %v189 = vadd.f32 0.0, %v188
    %v190 = vpop.f32.mrb[0].mxu0
    %191 = vdwg.mxu0
    %v198 = vunpack.c.l.b16 %v46
    %v199 = vunpack.c.l.b16 %v47
    %v200 = vunpack.c.l.b16 %v48
    %v201 = vunpack.c.l.b16 %v49
    %v202 = vunpack.c.l.b16 %v50
    %v203 = vunpack.c.l.b16 %v51
    %v204 = vpack.c.b16 %v199, %v198
    %v205 = vpack.c.b16 %v201, %v200
    %v206 = vpack.c.b16 %v203, %v202
    %v213 = vunpack.c.l.b16 %v60
    %v214 = vunpack.c.l.b16 %v61
    %v215 = vunpack.c.l.b16 %v62
    %v216 = vunpack.c.l.b16 %v63
    %v217 = vunpack.c.l.b16 %v64
    %v218 = vunpack.c.l.b16 %v65
    %v219 = vpack.c.b16 %v214, %v213
    %v220 = vpack.c.b16 %v216, %v215
    %v221 = vpack.c.b16 %v218, %v217
    %vm225 = vcmask 392192
    %v227 = vsel %vm225, %v204, 0
    %v230 = vsel %vm225, %v205, 0
    %v233 = vsel %vm225, %v206, 0
    %235 = vmatprep.subr.bf16.mxu0 0
    %236 = vmatpush1.bf16.msra.mxu0 %v219
    %237 = vmatprep.subr.bf16.mxu0 0
    %238 = vmatpush1.bf16.msra.mxu0 %v220
    %239 = vmatprep.subr.bf16.mxu0 0
    %240 = vmatpush1.bf16.msra.mxu0 %v221
    %241 = vmatprep.subr.bf16.mxu0 0
    %242 = vmatpush1.bf16.msra.mxu0 0
    %243 = vmatprep.subr.bf16.mxu0 0
    %244 = vmatpush1.bf16.msra.mxu0 0
    %245 = vmatprep.subr.bf16.mxu0 0
    %246 = vmatpush1.bf16.msra.mxu0 0
    %247 = vmatprep.subr.bf16.mxu0 0
    %248 = vmatpush1.bf16.msra.mxu0 0
    %249 = vmatprep.subr.bf16.mxu0 0
    %250 = vmatpush1.bf16.msra.mxu0 0
    %251 = vmatprep.subr.bf16.mxu0 0
    %252 = vmatpush1.bf16.msra.mxu0 0
    %253 = vmatprep.subr.bf16.mxu0 0
    %254 = vmatpush1.bf16.msra.mxu0 0
    %255 = vmatprep.subr.bf16.mxu0 0
    %256 = vmatpush1.bf16.msra.mxu0 0
    %257 = vmatprep.subr.bf16.mxu0 0
    %258 = vmatpush1.bf16.msra.mxu0 0
    %259 = vmatprep.subr.bf16.mxu0 0
    %260 = vmatpush1.bf16.msra.mxu0 0
    %261 = vmatprep.subr.bf16.mxu0 0
    %262 = vmatpush1.bf16.msra.mxu0 0
    %263 = vmatprep.subr.bf16.mxu0 0
    %264 = vmatpush1.bf16.msra.mxu0 0
    %265 = vmatprep.subr.bf16.mxu0 0
    %266 = vmatpush1.bf16.msra.mxu0 0
    %267 = vmatprep.mubr.bf16.mxu0 0
    %268 = vmatmul.mubr.bf16.gmra.mrb[0].mxu0 %v227
    %v269 = vpop.f32.mrb[0].mxu0
    %v270 = vadd.f32 0.0, %v269
    %v271 = vpop.f32.mrb[0].mxu0
    %v272 = vpop.f32.mrb[0].mxu0
    %v273 = vadd.f32 0.0, %v272
    %v274 = vpop.f32.mrb[0].mxu0
    %275 = vmatprep.mubr.bf16.mxu0 0
    %276 = vmatmul.mubr.bf16.gmra.mrb[0].mxu0 %v230
    %v277 = vpop.f32.mrb[0].mxu0
    %v278 = vadd.f32 0.0, %v277
    %v279 = vpop.f32.mrb[0].mxu0
    %v280 = vpop.f32.mrb[0].mxu0
    %v281 = vadd.f32 0.0, %v280
    %v282 = vpop.f32.mrb[0].mxu0
    %283 = vmatprep.mubr.bf16.mxu0 0
    %284 = vmatmul.mubr.bf16.gmra.mrb[0].mxu0 %v233
    %v285 = vpop.f32.mrb[0].mxu0
    %v286 = vadd.f32 0.0, %v285
    %v287 = vpop.f32.mrb[0].mxu0
    %v288 = vpop.f32.mrb[0].mxu0
    %v289 = vadd.f32 0.0, %v288
    %v290 = vpop.f32.mrb[0].mxu0
    %291 = vdwg.mxu0
    %v292 = vpack.c.bf16 %v165, %v162
    %v293 = vpack.c.bf16 %v173, %v170
    %v294 = vpack.c.bf16 %v181, %v178
    %v295 = vpack.c.bf16 %v189, %v186
    %v296 = vpack.c.bf16 %v273, %v270
    %v297 = vpack.c.bf16 %v281, %v278
    %v298 = vpack.c.bf16 %v289, %v286
    %v299 = vunpack.c.l.bf16 %v292
    %v300 = vunpack.c.h.bf16 %v292
    %v301 = vunpack.c.l.bf16 %v293
    %v302 = vunpack.c.h.bf16 %v293
    %v303 = vunpack.c.l.bf16 %v294
    %v304 = vunpack.c.h.bf16 %v294
    %v305 = vunpack.c.l.bf16 %v295
    %v306 = vunpack.c.h.bf16 %v295
    %v307 = vunpack.c.l.bf16 %v296
    %v308 = vunpack.c.h.bf16 %v296
    %v309 = vunpack.c.l.bf16 %v297
    %v310 = vunpack.c.h.bf16 %v297
    %v311 = vunpack.c.l.bf16 %v298
    %v312 = vunpack.c.h.bf16 %v298
    %vm313 = vcmask 130048
    %v315 = vsel %vm313, %v292, 0
    %v318 = vsel %vm313, %v293, 0
    %v321 = vsel %vm313, %v294, 0
    %v324 = vsel %vm313, %v295, 0
    %326 = vmatprep.subr.bf16.mxu0 0
    %327 = vmatpush1.bf16.xpose.msra.mxu0 %v315
    %328 = vmatprep.subr.bf16.mxu0 0
    %329 = vmatpush1.bf16.xpose.msra.mxu0 %v318
    %330 = vmatprep.subr.bf16.mxu0 0
    %331 = vmatpush1.bf16.xpose.msra.mxu0 %v321
    %332 = vmatprep.subr.bf16.mxu0 0
    %333 = vmatpush1.bf16.xpose.msra.mxu0 %v324
    %334 = vmatprep.subr.bf16.mxu0 0
    %335 = vmatpush1.bf16.xpose.msra.mxu0 0
    %336 = vmatprep.subr.bf16.mxu0 0
    %337 = vmatpush1.bf16.xpose.msra.mxu0 0
    %338 = vmatprep.subr.bf16.mxu0 0
    %339 = vmatpush1.bf16.xpose.msra.mxu0 0
    %340 = vmatprep.subr.bf16.mxu0 0
    %341 = vmatpush1.bf16.xpose.msra.mxu0 0
    %342 = vmatprep.subr.bf16.mxu0 0
    %343 = vmatpush1.bf16.xpose.msra.mxu0 0
    %344 = vmatprep.subr.bf16.mxu0 0
    %345 = vmatpush1.bf16.xpose.msra.mxu0 0
    %346 = vmatprep.subr.bf16.mxu0 0
    %347 = vmatpush1.bf16.xpose.msra.mxu0 0
    %348 = vmatprep.subr.bf16.mxu0 0
    %349 = vmatpush1.bf16.xpose.msra.mxu0 0
    %350 = vmatprep.subr.bf16.mxu0 0
    %351 = vmatpush1.bf16.xpose.msra.mxu0 0
    %352 = vmatprep.subr.bf16.mxu0 0
    %353 = vmatpush1.bf16.xpose.msra.mxu0 0
    %354 = vmatprep.subr.bf16.mxu0 0
    %355 = vmatpush1.bf16.xpose.msra.mxu0 0
    %356 = vmatprep.subr.bf16.mxu0 0
    %357 = vmatpush1.bf16.xpose.msra.mxu0 0
    %358 = vmatprep.mubr.bf16.mxu0 0
    %359 = vmatmul.mubr.bf16.gmra.mrb[0].mxu0 %v315
    %v360 = vpop.f32.mrb[0].mxu0
    %v361 = vadd.f32 0.0, %v360
    %v362 = vpop.f32.mrb[0].mxu0
    %v363 = vpop.f32.mrb[0].mxu0
    %v364 = vadd.f32 0.0, %v363
    %v365 = vpop.f32.mrb[0].mxu0
    %366 = vmatprep.mubr.bf16.mxu0 0
    %367 = vmatmul.mubr.bf16.gmra.mrb[0].mxu0 %v318
    %v368 = vpop.f32.mrb[0].mxu0
    %v369 = vadd.f32 0.0, %v368
    %v370 = vpop.f32.mrb[0].mxu0
    %v371 = vpop.f32.mrb[0].mxu0
    %v372 = vadd.f32 0.0, %v371
    %v373 = vpop.f32.mrb[0].mxu0
    %374 = vmatprep.mubr.bf16.mxu0 0
    %375 = vmatmul.mubr.bf16.gmra.mrb[0].mxu0 %v321
    %v376 = vpop.f32.mrb[0].mxu0
    %v377 = vadd.f32 0.0, %v376
    %v378 = vpop.f32.mrb[0].mxu0
    %v379 = vpop.f32.mrb[0].mxu0
    %v380 = vadd.f32 0.0, %v379
    %v381 = vpop.f32.mrb[0].mxu0
    %382 = vmatprep.mubr.bf16.mxu0 0
    %383 = vmatmul.mubr.bf16.gmra.mrb[0].mxu0 %v324
    %v384 = vpop.f32.mrb[0].mxu0
    %v385 = vadd.f32 0.0, %v384
    %v386 = vpop.f32.mrb[0].mxu0
    %v387 = vpop.f32.mrb[0].mxu0
    %v388 = vadd.f32 0.0, %v387
    %v389 = vpop.f32.mrb[0].mxu0
    %390 = vdwg.mxu0
    %v392 = vsel %vm313, %v296, 0
    %v395 = vsel %vm313, %v297, 0
    %v398 = vsel %vm313, %v298, 0
    %400 = vmatprep.subr.bf16.mxu0 0
    %401 = vmatpush1.bf16.xpose.msra.mxu0 %v392
    %402 = vmatprep.subr.bf16.mxu0 0
    %403 = vmatpush1.bf16.xpose.msra.mxu0 %v395
    %404 = vmatprep.subr.bf16.mxu0 0
    %405 = vmatpush1.bf16.xpose.msra.mxu0 %v398
    %406 = vmatprep.subr.bf16.mxu0 0
    %407 = vmatpush1.bf16.xpose.msra.mxu0 0
    %408 = vmatprep.subr.bf16.mxu0 0
    %409 = vmatpush1.bf16.xpose.msra.mxu0 0
    %410 = vmatprep.subr.bf16.mxu0 0
    %411 = vmatpush1.bf16.xpose.msra.mxu0 0
    %412 = vmatprep.subr.bf16.mxu0 0
    %413 = vmatpush1.bf16.xpose.msra.mxu0 0
    %414 = vmatprep.subr.bf16.mxu0 0
    %415 = vmatpush1.bf16.xpose.msra.mxu0 0
    %416 = vmatprep.subr.bf16.mxu0 0
    %417 = vmatpush1.bf16.xpose.msra.mxu0 0
    %418 = vmatprep.subr.bf16.mxu0 0
    %419 = vmatpush1.bf16.xpose.msra.mxu0 0
    %420 = vmatprep.subr.bf16.mxu0 0
    %421 = vmatpush1.bf16.xpose.msra.mxu0 0
    %422 = vmatprep.subr.bf16.mxu0 0
    %423 = vmatpush1.bf16.xpose.msra.mxu0 0
    %424 = vmatprep.subr.bf16.mxu0 0
    %425 = vmatpush1.bf16.xpose.msra.mxu0 0
    %426 = vmatprep.subr.bf16.mxu0 0
    %427 = vmatpush1.bf16.xpose.msra.mxu0 0
    %428 = vmatprep.subr.bf16.mxu0 0
    %429 = vmatpush1.bf16.xpose.msra.mxu0 0
    %430 = vmatprep.subr.bf16.mxu0 0
    %431 = vmatpush1.bf16.xpose.msra.mxu0 0
    %432 = vmatprep.mubr.bf16.mxu0 0
    %433 = vmatmul.mubr.bf16.gmra.mrb[0].mxu0 %v392
    %v434 = vpop.f32.mrb[0].mxu0
    %v435 = vadd.f32 0.0, %v434
    %v436 = vpop.f32.mrb[0].mxu0
    %v437 = vpop.f32.mrb[0].mxu0
    %v438 = vadd.f32 0.0, %v437
    %v439 = vpop.f32.mrb[0].mxu0
    %440 = vmatprep.mubr.bf16.mxu0 0
    %441 = vmatmul.mubr.bf16.gmra.mrb[0].mxu0 %v395
    %v442 = vpop.f32.mrb[0].mxu0
    %v443 = vadd.f32 0.0, %v442
    %v444 = vpop.f32.mrb[0].mxu0
    %v445 = vpop.f32.mrb[0].mxu0
    %v446 = vadd.f32 0.0, %v445
    %v447 = vpop.f32.mrb[0].mxu0
    %448 = vmatprep.mubr.bf16.mxu0 0
    %449 = vmatmul.mubr.bf16.gmra.mrb[0].mxu0 %v398
    %v450 = vpop.f32.mrb[0].mxu0
    %v451 = vadd.f32 0.0, %v450
    %v452 = vpop.f32.mrb[0].mxu0
    %v453 = vpop.f32.mrb[0].mxu0
    %v454 = vadd.f32 0.0, %v453
    %v455 = vpop.f32.mrb[0].mxu0
    %456 = vdwg.mxu0
    %457 = vmatprep.subr.bf16.mxu0 0
    %458 = vmatpush1.bf16.xpose.msra.mxu0 %v392
    %459 = vmatprep.subr.bf16.mxu0 0
    %460 = vmatpush1.bf16.xpose.msra.mxu0 %v395
    %461 = vmatprep.subr.bf16.mxu0 0
    %462 = vmatpush1.bf16.xpose.msra.mxu0 %v398
    %463 = vmatprep.subr.bf16.mxu0 0
    %464 = vmatpush1.bf16.xpose.msra.mxu0 0
    %465 = vmatprep.subr.bf16.mxu0 0
    %466 = vmatpush1.bf16.xpose.msra.mxu0 0
    %467 = vmatprep.subr.bf16.mxu0 0
    %468 = vmatpush1.bf16.xpose.msra.mxu0 0
    %469 = vmatprep.subr.bf16.mxu0 0
    %470 = vmatpush1.bf16.xpose.msra.mxu0 0
    %471 = vmatprep.subr.bf16.mxu0 0
    %472 = vmatpush1.bf16.xpose.msra.mxu0 0
    %473 = vmatprep.subr.bf16.mxu0 0
    %474 = vmatpush1.bf16.xpose.msra.mxu0 0
    %475 = vmatprep.subr.bf16.mxu0 0
    %476 = vmatpush1.bf16.xpose.msra.mxu0 0
    %477 = vmatprep.subr.bf16.mxu0 0
    %478 = vmatpush1.bf16.xpose.msra.mxu0 0
    %479 = vmatprep.subr.bf16.mxu0 0
    %480 = vmatpush1.bf16.xpose.msra.mxu0 0
    %481 = vmatprep.subr.bf16.mxu0 0
    %482 = vmatpush1.bf16.xpose.msra.mxu0 0
    %483 = vmatprep.subr.bf16.mxu0 0
    %484 = vmatpush1.bf16.xpose.msra.mxu0 0
    %485 = vmatprep.subr.bf16.mxu0 0
    %486 = vmatpush1.bf16.xpose.msra.mxu0 0
    %487 = vmatprep.subr.bf16.mxu0 0
    %488 = vmatpush1.bf16.xpose.msra.mxu0 0
    %489 = vmatprep.mubr.bf16.mxu0 0
    %490 = vmatmul.mubr.bf16.gmra.mrb[0].mxu0 %v315
    %v491 = vpop.f32.mrb[0].mxu0
    %v492 = vadd.f32 0.0, %v491
    %v493 = vpop.f32.mrb[0].mxu0
    %v494 = vpop.f32.mrb[0].mxu0
    %v495 = vadd.f32 0.0, %v494
    %v496 = vpop.f32.mrb[0].mxu0
    %497 = vmatprep.mubr.bf16.mxu0 0
    %498 = vmatmul.mubr.bf16.gmra.mrb[0].mxu0 %v318
    %v499 = vpop.f32.mrb[0].mxu0
    %v500 = vadd.f32 0.0, %v499
    %v501 = vpop.f32.mrb[0].mxu0
    %v502 = vpop.f32.mrb[0].mxu0
    %v503 = vadd.f32 0.0, %v502
    %v504 = vpop.f32.mrb[0].mxu0
    %505 = vmatprep.mubr.bf16.mxu0 0
    %506 = vmatmul.mubr.bf16.gmra.mrb[0].mxu0 %v321
    %v507 = vpop.f32.mrb[0].mxu0
    %v508 = vadd.f32 0.0, %v507
    %v509 = vpop.f32.mrb[0].mxu0
    %v510 = vpop.f32.mrb[0].mxu0
    %v511 = vadd.f32 0.0, %v510
    %v512 = vpop.f32.mrb[0].mxu0
    %513 = vmatprep.mubr.bf16.mxu0 0
    %514 = vmatmul.mubr.bf16.gmra.mrb[0].mxu0 %v324
    %v515 = vpop.f32.mrb[0].mxu0
    %v516 = vadd.f32 0.0, %v515
    %v517 = vpop.f32.mrb[0].mxu0
    %v518 = vpop.f32.mrb[0].mxu0
    %v519 = vadd.f32 0.0, %v518
    %v520 = vpop.f32.mrb[0].mxu0
    %521 = vdwg.mxu0
    %v522 = vmul.f32 %v299, %v299
    %v523 = vmul.f32 %v300, %v300
    %v524 = vmul.f32 %v301, %v301
    %v525 = vmul.f32 %v302, %v302
    %v526 = vmul.f32 %v303, %v303
    %v527 = vmul.f32 %v304, %v304
    %v528 = vmul.f32 %v305, %v305
    %v529 = vmul.f32 %v306, %v306
    %v530 = vsel %vm313, %v522, 0.0
    %531 = vadd.xlane.f32.xlu0 %v530
    %v532 = vpop.xlane.xlu0 %531
    %v533 = vsel %vm313, %v523, 0.0
    %534 = vadd.xlane.f32.xlu0 %v533
    %v535 = vpop.xlane.xlu0 %534
    %v536 = vsel %vm313, %v524, 0.0
    %537 = vadd.xlane.f32.xlu0 %v536
    %v538 = vpop.xlane.xlu0 %537
    %v539 = vsel %vm313, %v525, 0.0
    %540 = vadd.xlane.f32.xlu0 %v539
    %v541 = vpop.xlane.xlu0 %540
    %v542 = vsel %vm313, %v526, 0.0
    %543 = vadd.xlane.f32.xlu0 %v542
    %v544 = vpop.xlane.xlu0 %543
    %v545 = vsel %vm313, %v527, 0.0
    %546 = vadd.xlane.f32.xlu0 %v545
    %v547 = vpop.xlane.xlu0 %546
    %v548 = vsel %vm313, %v528, 0.0
    %549 = vadd.xlane.f32.xlu0 %v548
    %v550 = vpop.xlane.xlu0 %549
    %v551 = vsel %vm313, %v529, 0.0
    %552 = vadd.xlane.f32.xlu0 %v551
    %v553 = vpop.xlane.xlu0 %552
    %v554 = vmul.f32 %v307, %v307
    %v555 = vmul.f32 %v308, %v308
    %v556 = vmul.f32 %v309, %v309
    %v557 = vmul.f32 %v310, %v310
    %v558 = vmul.f32 %v311, %v311
    %v559 = vmul.f32 %v312, %v312
    %v560 = vsel %vm313, %v554, 0.0
    %561 = vadd.xlane.f32.xlu0 %v560
    %v562 = vpop.xlane.xlu0 %561
    %v563 = vsel %vm313, %v555, 0.0
    %564 = vadd.xlane.f32.xlu0 %v563
    %v565 = vpop.xlane.xlu0 %564
    %v566 = vsel %vm313, %v556, 0.0
    %567 = vadd.xlane.f32.xlu0 %v566
    %v568 = vpop.xlane.xlu0 %567
    %v569 = vsel %vm313, %v557, 0.0
    %570 = vadd.xlane.f32.xlu0 %v569
    %v571 = vpop.xlane.xlu0 %570
    %v572 = vsel %vm313, %v558, 0.0
    %573 = vadd.xlane.f32.xlu0 %v572
    %v574 = vpop.xlane.xlu0 %573
    %v575 = vsel %vm313, %v559, 0.0
    %576 = vadd.xlane.f32.xlu0 %v575
    %v577 = vpop.xlane.xlu0 %576
    %578 = vxpose.xlu0.b32.start [1/16] %v532, 128
    %579 = vxpose.xlu0.b32.cont [2/16] %v535, 128
    %580 = vxpose.xlu0.b32.cont [3/16] %v538, 128
    %581 = vxpose.xlu0.b32.cont [4/16] %v541, 128
    %582 = vxpose.xlu0.b32.cont [5/16] %v544, 128
    %583 = vxpose.xlu0.b32.cont [6/16] %v547, 128
    %584 = vxpose.xlu0.b32.cont [7/16] %v550, 128
    %585 = vxpose.xlu0.b32.cont [8/16] %v553, 128
    %586 = vxpose.xlu0.b32.cont [9/16] 0.0, 128
    %587 = vxpose.xlu0.b32.cont [10/16] 0.0, 128
    %588 = vxpose.xlu0.b32.cont [11/16] 0.0, 128
    %589 = vxpose.xlu0.b32.cont [12/16] 0.0, 128
    %590 = vxpose.xlu0.b32.cont [13/16] 0.0, 128
    %591 = vxpose.xlu0.b32.cont [14/16] 0.0, 128
    %592 = vxpose.xlu0.b32.cont [15/16] 0.0, 128
    %593 = vxpose.xlu0.b32.end [16/16] 0.0, 128
    %v594 = vpop.trf.xlu0
    %v595 = vpop.trf.xlu0
    %v596 = vpop.trf.xlu0
    %v597 = vpop.trf.xlu0
    %v598 = vpop.trf.xlu0
    %v599 = vpop.trf.xlu0
    %v600 = vpop.trf.xlu0
    %v601 = vpop.trf.xlu0
    %v602 = vpop.trf.xlu0
    %v603 = vpop.trf.xlu0
    %v604 = vpop.trf.xlu0
    %v605 = vpop.trf.xlu0
    %v606 = vpop.trf.xlu0
    %v607 = vpop.trf.xlu0
    %v608 = vpop.trf.xlu0
    %v609 = vpop.trf.xlu0
    %v610 = vlaneseq
    %v611 = vshrl.u32 %v610, 7
    %v612 = vsub.s32 0, %v611
    %v613 = vrot.slane %v594, %v612
    %v614 = vadd.f32 %v532, %v613
    %v615 = vadd.f32 %v535, %v613
    %v616 = vadd.f32 %v538, %v613
    %v617 = vadd.f32 %v541, %v613
    %v618 = vadd.f32 %v544, %v613
    %v619 = vadd.f32 %v547, %v613
    %v620 = vadd.f32 %v550, %v613
    %v621 = vadd.f32 %v553, %v613
    %v622 = vmul.f32 %v361, 2.0
    %v623 = vmul.f32 %v364, 2.0
    %v624 = vmul.f32 %v369, 2.0
    %v625 = vmul.f32 %v372, 2.0
    %v626 = vmul.f32 %v377, 2.0
    %v627 = vmul.f32 %v380, 2.0
    %v628 = vmul.f32 %v385, 2.0
    %v629 = vmul.f32 %v388, 2.0
    %v630 = vsub.f32 %v614, %v622
    %v631 = vsub.f32 %v615, %v623
    %v632 = vsub.f32 %v616, %v624
    %v633 = vsub.f32 %v617, %v625
    %v634 = vsub.f32 %v618, %v626
    %v635 = vsub.f32 %v619, %v627
    %v636 = vsub.f32 %v620, %v628
    %v637 = vsub.f32 %v621, %v629
    %v638 = vmax.f32 %v630, 0.0
    %v639 = vmax.f32 %v631, 0.0
    %v640 = vmax.f32 %v632, 0.0
    %v641 = vmax.f32 %v633, 0.0
    %v642 = vmax.f32 %v634, 0.0
    %v643 = vmax.f32 %v635, 0.0
    %v644 = vmax.f32 %v636, 0.0
    %v645 = vmax.f32 %v637, 0.0
    %646 = vxpose.xlu0.b32.start [1/16] %v562, 128
    %647 = vxpose.xlu0.b32.cont [2/16] %v565, 128
    %648 = vxpose.xlu0.b32.cont [3/16] %v568, 128
    %649 = vxpose.xlu0.b32.cont [4/16] %v571, 128
    %650 = vxpose.xlu0.b32.cont [5/16] %v574, 128
    %651 = vxpose.xlu0.b32.cont [6/16] %v577, 128
    %652 = vxpose.xlu0.b32.cont [7/16] 0.0, 128
    %653 = vxpose.xlu0.b32.cont [8/16] 0.0, 128
    %654 = vxpose.xlu0.b32.cont [9/16] 0.0, 128
    %655 = vxpose.xlu0.b32.cont [10/16] 0.0, 128
    %656 = vxpose.xlu0.b32.cont [11/16] 0.0, 128
    %657 = vxpose.xlu0.b32.cont [12/16] 0.0, 128
    %658 = vxpose.xlu0.b32.cont [13/16] 0.0, 128
    %659 = vxpose.xlu0.b32.cont [14/16] 0.0, 128
    %660 = vxpose.xlu0.b32.cont [15/16] 0.0, 128
    %661 = vxpose.xlu0.b32.end [16/16] 0.0, 128
    %v662 = vpop.trf.xlu0
    %v663 = vpop.trf.xlu0
    %v664 = vpop.trf.xlu0
    %v665 = vpop.trf.xlu0
    %v666 = vpop.trf.xlu0
    %v667 = vpop.trf.xlu0
    %v668 = vpop.trf.xlu0
    %v669 = vpop.trf.xlu0
    %v670 = vpop.trf.xlu0
    %v671 = vpop.trf.xlu0
    %v672 = vpop.trf.xlu0
    %v673 = vpop.trf.xlu0
    %v674 = vpop.trf.xlu0
    %v675 = vpop.trf.xlu0
    %v676 = vpop.trf.xlu0
    %v677 = vpop.trf.xlu0
    %v678 = vlaneseq
    %v679 = vshrl.u32 %v678, 7
    %v680 = vsub.s32 0, %v679
    %v681 = vrot.slane %v662, %v680
    %v682 = vadd.f32 %v562, %v681
    %v683 = vadd.f32 %v565, %v681
    %v684 = vadd.f32 %v568, %v681
    %v685 = vadd.f32 %v571, %v681
    %v686 = vadd.f32 %v574, %v681
    %v687 = vadd.f32 %v577, %v681
    %v688 = vmul.f32 %v435, 2.0
    %v689 = vmul.f32 %v438, 2.0
    %v690 = vmul.f32 %v443, 2.0
    %v691 = vmul.f32 %v446, 2.0
    %v692 = vmul.f32 %v451, 2.0
    %v693 = vmul.f32 %v454, 2.0
    %v694 = vsub.f32 %v682, %v688
    %v695 = vsub.f32 %v683, %v689
    %v696 = vsub.f32 %v684, %v690
    %v697 = vsub.f32 %v685, %v691
    %v698 = vsub.f32 %v686, %v692
    %v699 = vsub.f32 %v687, %v693
    %v700 = vmax.f32 %v694, 0.0
    %v701 = vmax.f32 %v695, 0.0
    %v702 = vmax.f32 %v696, 0.0
    %v703 = vmax.f32 %v697, 0.0
    %v704 = vmax.f32 %v698, 0.0
    %v705 = vmax.f32 %v699, 0.0
    %v706 = vadd.f32 %v532, %v681
    %v707 = vadd.f32 %v535, %v681
    %v708 = vadd.f32 %v538, %v681
    %v709 = vadd.f32 %v541, %v681
    %v710 = vadd.f32 %v544, %v681
    %v711 = vadd.f32 %v547, %v681
    %v712 = vadd.f32 %v550, %v681
    %v713 = vadd.f32 %v553, %v681
    %v714 = vmul.f32 %v492, 2.0
    %v715 = vmul.f32 %v495, 2.0
    %v716 = vmul.f32 %v500, 2.0
    %v717 = vmul.f32 %v503, 2.0
    %v718 = vmul.f32 %v508, 2.0
    %v719 = vmul.f32 %v511, 2.0
    %v720 = vmul.f32 %v516, 2.0
    %v721 = vmul.f32 %v519, 2.0
    %v722 = vsub.f32 %v706, %v714
    %v723 = vsub.f32 %v707, %v715
    %v724 = vsub.f32 %v708, %v716
    %v725 = vsub.f32 %v709, %v717
    %v726 = vsub.f32 %v710, %v718
    %v727 = vsub.f32 %v711, %v719
    %v728 = vsub.f32 %v712, %v720
    %v729 = vsub.f32 %v713, %v721
    %v730 = vmax.f32 %v722, 0.0
    %v731 = vmax.f32 %v723, 0.0
    %v732 = vmax.f32 %v724, 0.0
    %v733 = vmax.f32 %v725, 0.0
    %v734 = vmax.f32 %v726, 0.0
    %v735 = vmax.f32 %v727, 0.0
    %v736 = vmax.f32 %v728, 0.0
    %v737 = vmax.f32 %v729, 0.0
    %s738 = sld [smem:[#allocation2 + $0x2]]
    %v739 = vstv %s738
    %v740 = vrcp.pop %v739
    %s741 = vtos %v740
    %s742 = smul.f32 0.5, %s741
    %s743 = ssub.f32 0.0, %s742
    %v744 = vstv %s743
    %v745 = vmul.f32 %v744, %v638
    %v746 = vmul.f32 %v744, %v639
    %v747 = vmul.f32 %v744, %v640
    %v748 = vmul.f32 %v744, %v641
    %v749 = vmul.f32 %v744, %v642
    %v750 = vmul.f32 %v744, %v643
    %v751 = vmul.f32 %v744, %v644
    %v752 = vmul.f32 %v744, %v645
    %v753 = vmul.f32 %v745, 1.442695
    %v754 = vpow.pop %v753
    %v755 = vmul.f32 %v746, 1.442695
    %v756 = vpow.pop %v755
    %v757 = vmul.f32 %v747, 1.442695
    %v758 = vpow.pop %v757
    %v759 = vmul.f32 %v748, 1.442695
    %v760 = vpow.pop %v759
    %v761 = vmul.f32 %v749, 1.442695
    %v762 = vpow.pop %v761
    %v763 = vmul.f32 %v750, 1.442695
    %v764 = vpow.pop %v763
    %v765 = vmul.f32 %v751, 1.442695
    %v766 = vpow.pop %v765
    %v767 = vmul.f32 %v752, 1.442695
    %v768 = vpow.pop %v767
    %v769 = vadd.f32 %v754, 0.0
    %v770 = vadd.f32 %v756, 0.0
    %v771 = vadd.f32 %v758, 0.0
    %v772 = vadd.f32 %v760, 0.0
    %v773 = vadd.f32 %v762, 0.0
    %v774 = vadd.f32 %v764, 0.0
    %v775 = vadd.f32 %v766, 0.0
    %v776 = vadd.f32 %v768, 0.0
    %s777 = sld [smem:[#allocation2 + $0x3]]
    %v778 = vstv %s777
    %v779 = vrcp.pop %v778
    %s780 = vtos %v779
    %s781 = smul.f32 0.5, %s780
    %s782 = ssub.f32 0.0, %s781
    %v783 = vstv %s782
    %v784 = vmul.f32 %v783, %v638
    %v785 = vmul.f32 %v783, %v639
    %v786 = vmul.f32 %v783, %v640
    %v787 = vmul.f32 %v783, %v641
    %v788 = vmul.f32 %v783, %v642
    %v789 = vmul.f32 %v783, %v643
    %v790 = vmul.f32 %v783, %v644
    %v791 = vmul.f32 %v783, %v645
    %v792 = vmul.f32 %v784, 1.442695
    %v793 = vpow.pop %v792
    %v794 = vmul.f32 %v785, 1.442695
    %v795 = vpow.pop %v794
    %v796 = vmul.f32 %v786, 1.442695
    %v797 = vpow.pop %v796
    %v798 = vmul.f32 %v787, 1.442695
    %v799 = vpow.pop %v798
    %v800 = vmul.f32 %v788, 1.442695
    %v801 = vpow.pop %v800
    %v802 = vmul.f32 %v789, 1.442695
    %v803 = vpow.pop %v802
    %v804 = vmul.f32 %v790, 1.442695
    %v805 = vpow.pop %v804
    %v806 = vmul.f32 %v791, 1.442695
    %v807 = vpow.pop %v806
    %v808 = vadd.f32 %v769, %v793
    %v809 = vadd.f32 %v770, %v795
    %v810 = vadd.f32 %v771, %v797
    %v811 = vadd.f32 %v772, %v799
    %v812 = vadd.f32 %v773, %v801
    %v813 = vadd.f32 %v774, %v803
    %v814 = vadd.f32 %v775, %v805
    %v815 = vadd.f32 %v776, %v807
    %v816 = vsel %vm114, %v808, 0.0
    %v817 = vsel %vm114, %v809, 0.0
    %v818 = vadd.f32 %v816, %v817
    %v819 = vsel %vm114, %v810, 0.0
    %v820 = vadd.f32 %v818, %v819
    %v821 = vsel %vm114, %v811, 0.0
    %v822 = vadd.f32 %v820, %v821
    %v823 = vsel %vm114, %v812, 0.0
    %v824 = vadd.f32 %v822, %v823
    %v825 = vsel %vm114, %v813, 0.0
    %v826 = vadd.f32 %v824, %v825
    %v827 = vsel %vm114, %v814, 0.0
    %v828 = vadd.f32 %v826, %v827
    %v829 = vsel %vm114, %v815, 0.0
    %v830 = vadd.f32 %v828, %v829
    %831 = vadd.xlane.f32.xlu0 %v830
    %v832 = vpop.xlane.xlu0 %831
    %v833 = vrot.slane %v832, 4
    %v834 = vadd.f32 %v832, %v833
    %v835 = vrot.slane %v834, 2
    %v836 = vadd.f32 %v834, %v835
    %v837 = vrot.slane %v836, 1
    %v838 = vadd.f32 %v836, %v837
    %s839 = vtos %v838
    %s840 = smul.f32 %s839, 0.00024414063
    %v841 = vmul.f32 %v744, %v700
    %v842 = vmul.f32 %v744, %v701
    %v843 = vmul.f32 %v744, %v702
    %v844 = vmul.f32 %v744, %v703
    %v845 = vmul.f32 %v744, %v704
    %v846 = vmul.f32 %v744, %v705
    %v847 = vmul.f32 %v841, 1.442695
    %v848 = vpow.pop %v847
    %v849 = vmul.f32 %v842, 1.442695
    %v850 = vpow.pop %v849
    %v851 = vmul.f32 %v843, 1.442695
    %v852 = vpow.pop %v851
    %v853 = vmul.f32 %v844, 1.442695
    %v854 = vpow.pop %v853
    %v855 = vmul.f32 %v845, 1.442695
    %v856 = vpow.pop %v855
    %v857 = vmul.f32 %v846, 1.442695
    %v858 = vpow.pop %v857
    %v859 = vadd.f32 %v848, 0.0
    %v860 = vadd.f32 %v850, 0.0
    %v861 = vadd.f32 %v852, 0.0
    %v862 = vadd.f32 %v854, 0.0
    %v863 = vadd.f32 %v856, 0.0
    %v864 = vadd.f32 %v858, 0.0
    %v865 = vmul.f32 %v783, %v700
    %v866 = vmul.f32 %v783, %v701
    %v867 = vmul.f32 %v783, %v702
    %v868 = vmul.f32 %v783, %v703
    %v869 = vmul.f32 %v783, %v704
    %v870 = vmul.f32 %v783, %v705
    %v871 = vmul.f32 %v865, 1.442695
    %v872 = vpow.pop %v871
    %v873 = vmul.f32 %v866, 1.442695
    %v874 = vpow.pop %v873
    %v875 = vmul.f32 %v867, 1.442695
    %v876 = vpow.pop %v875
    %v877 = vmul.f32 %v868, 1.442695
    %v878 = vpow.pop %v877
    %v879 = vmul.f32 %v869, 1.442695
    %v880 = vpow.pop %v879
    %v881 = vmul.f32 %v870, 1.442695
    %v882 = vpow.pop %v881
    %v883 = vadd.f32 %v859, %v872
    %v884 = vadd.f32 %v860, %v874
    %v885 = vadd.f32 %v861, %v876
    %v886 = vadd.f32 %v862, %v878
    %v887 = vadd.f32 %v863, %v880
    %v888 = vadd.f32 %v864, %v882
    %v889 = vsel %vm225, %v883, 0.0
    %v890 = vsel %vm225, %v884, 0.0
    %v891 = vadd.f32 %v889, %v890
    %v892 = vsel %vm225, %v885, 0.0
    %v893 = vadd.f32 %v891, %v892
    %v894 = vsel %vm225, %v886, 0.0
    %v895 = vadd.f32 %v893, %v894
    %v896 = vsel %vm225, %v887, 0.0
    %v897 = vadd.f32 %v895, %v896
    %v898 = vsel %vm225, %v888, 0.0
    %v899 = vadd.f32 %v897, %v898
    %900 = vadd.xlane.f32.xlu0 %v899
    %v901 = vpop.xlane.xlu0 %900
    %v902 = vrot.slane %v901, 4
    %v903 = vadd.f32 %v901, %v902
    %v904 = vrot.slane %v903, 2
    %v905 = vadd.f32 %v903, %v904
    %v906 = vrot.slane %v905, 1
    %v907 = vadd.f32 %v905, %v906
    %s908 = vtos %v907
    %s909 = smul.f32 %s908, 0.00043402778
    %s910 = sadd.f32 %s840, %s909
    %v911 = vmul.f32 %v744, %v730
    %v912 = vmul.f32 %v744, %v731
    %v913 = vmul.f32 %v744, %v732
    %v914 = vmul.f32 %v744, %v733
    %v915 = vmul.f32 %v744, %v734
    %v916 = vmul.f32 %v744, %v735
    %v917 = vmul.f32 %v744, %v736
    %v918 = vmul.f32 %v744, %v737
    %v919 = vmul.f32 %v911, 1.442695
    %v920 = vpow.pop %v919
    %v921 = vmul.f32 %v912, 1.442695
    %v922 = vpow.pop %v921
    %v923 = vmul.f32 %v913, 1.442695
    %v924 = vpow.pop %v923
    %v925 = vmul.f32 %v914, 1.442695
    %v926 = vpow.pop %v925
    %v927 = vmul.f32 %v915, 1.442695
    %v928 = vpow.pop %v927
    %v929 = vmul.f32 %v916, 1.442695
    %v930 = vpow.pop %v929
    %v931 = vmul.f32 %v917, 1.442695
    %v932 = vpow.pop %v931
    %v933 = vmul.f32 %v918, 1.442695
    %v934 = vpow.pop %v933
    %v935 = vadd.f32 %v920, 0.0
    %v936 = vadd.f32 %v922, 0.0
    %v937 = vadd.f32 %v924, 0.0
    %v938 = vadd.f32 %v926, 0.0
    %v939 = vadd.f32 %v928, 0.0
    %v940 = vadd.f32 %v930, 0.0
    %v941 = vadd.f32 %v932, 0.0
    %v942 = vadd.f32 %v934, 0.0
    %v943 = vmul.f32 %v783, %v730
    %v944 = vmul.f32 %v783, %v731
    %v945 = vmul.f32 %v783, %v732
    %v946 = vmul.f32 %v783, %v733
    %v947 = vmul.f32 %v783, %v734
    %v948 = vmul.f32 %v783, %v735
    %v949 = vmul.f32 %v783, %v736
    %v950 = vmul.f32 %v783, %v737
    %v951 = vmul.f32 %v943, 1.442695
    %v952 = vpow.pop %v951
    %v953 = vmul.f32 %v944, 1.442695
    %v954 = vpow.pop %v953
    %v955 = vmul.f32 %v945, 1.442695
    %v956 = vpow.pop %v955
    %v957 = vmul.f32 %v946, 1.442695
    %v958 = vpow.pop %v957
    %v959 = vmul.f32 %v947, 1.442695
    %v960 = vpow.pop %v959
    %v961 = vmul.f32 %v948, 1.442695
    %v962 = vpow.pop %v961
    %v963 = vmul.f32 %v949, 1.442695
    %v964 = vpow.pop %v963
    %v965 = vmul.f32 %v950, 1.442695
    %v966 = vpow.pop %v965
    %v967 = vadd.f32 %v935, %v952
    %v968 = vadd.f32 %v936, %v954
    %v969 = vadd.f32 %v937, %v956
    %v970 = vadd.f32 %v938, %v958
    %v971 = vadd.f32 %v939, %v960
    %v972 = vadd.f32 %v940, %v962
    %v973 = vadd.f32 %v941, %v964
    %v974 = vadd.f32 %v942, %v966
    %v975 = vsel %vm225, %v967, 0.0
    %v976 = vsel %vm225, %v968, 0.0
    %v977 = vadd.f32 %v975, %v976
    %v978 = vsel %vm225, %v969, 0.0
    %v979 = vadd.f32 %v977, %v978
    %v980 = vsel %vm225, %v970, 0.0
    %v981 = vadd.f32 %v979, %v980
    %v982 = vsel %vm225, %v971, 0.0
    %v983 = vadd.f32 %v981, %v982
    %v984 = vsel %vm225, %v972, 0.0
    %v985 = vadd.f32 %v983, %v984
    %v986 = vsel %vm225, %v973, 0.0
    %v987 = vadd.f32 %v985, %v986
    %v988 = vsel %vm225, %v974, 0.0
    %v989 = vadd.f32 %v987, %v988
    %990 = vadd.xlane.f32.xlu0 %v989
    %v991 = vpop.xlane.xlu0 %990
    %v992 = vrot.slane %v991, 4
    %v993 = vadd.f32 %v991, %v992
    %v994 = vrot.slane %v993, 2
    %v995 = vadd.f32 %v993, %v994
    %v996 = vrot.slane %v995, 1
    %v997 = vadd.f32 %v995, %v996
    %s998 = vtos %v997
    %s999 = smul.f32 %s998, 0.00032552084
    %s1000 = smul.f32 %s999, 2.0
    %s1001 = ssub.f32 %s910, %s1000
    %s1002 = smax.f32 %s1001, 0.0
    %s1003 = scalar_lea.smem [#allocation5], 0
    %1004 = sst [smem:[%s1003]] %s1002
    %1005 = vxpose.xlu0.c.b16.start [1/8] %v106, 128
    %1006 = vxpose.xlu0.c.b16.cont [2/8] %v107, 128
    %1007 = vxpose.xlu0.c.b16.cont [3/8] %v108, 128
    %1008 = vxpose.xlu0.c.b16.cont [4/8] %v109, 128
    %1009 = vxpose.xlu0.c.b16.cont [5/8] 0, 128
    %1010 = vxpose.xlu0.c.b16.cont [6/8] 0, 128
    %1011 = vxpose.xlu0.c.b16.cont [7/8] 0, 128
    %1012 = vxpose.xlu0.c.b16.end [8/8] 0, 128
    %v1013 = vpop.trf.xlu0
    %v1014 = vpop.trf.xlu0
    %v1015 = vpop.trf.xlu0
    %v1016 = vpop.trf.xlu0
    %v1017 = vpop.trf.xlu0
    %v1018 = vpop.trf.xlu0
    %v1019 = vpop.trf.xlu0
    %v1020 = vpop.trf.xlu0
    %v1022 = vsel %vm114, %v1013, 0
    %1024 = vmatprep.subr.bf16.mxu0 0
    %1025 = vmatpush1.bf16.msra.mxu0 %v292
    %1026 = vmatprep.subr.bf16.mxu0 0
    %1027 = vmatpush1.bf16.msra.mxu0 %v293
    %1028 = vmatprep.subr.bf16.mxu0 0
    %1029 = vmatpush1.bf16.msra.mxu0 %v294
    %1030 = vmatprep.subr.bf16.mxu0 0
    %1031 = vmatpush1.bf16.msra.mxu0 %v295
    %1032 = vmatprep.subr.bf16.mxu0 0
    %1033 = vmatpush1.bf16.msra.mxu0 0
    %1034 = vmatprep.subr.bf16.mxu0 0
    %1035 = vmatpush1.bf16.msra.mxu0 0
    %1036 = vmatprep.subr.bf16.mxu0 0
    %1037 = vmatpush1.bf16.msra.mxu0 0
    %1038 = vmatprep.subr.bf16.mxu0 0
    %1039 = vmatpush1.bf16.msra.mxu0 0
    %1040 = vmatprep.subr.bf16.mxu0 0
    %1041 = vmatpush1.bf16.msra.mxu0 0
    %1042 = vmatprep.subr.bf16.mxu0 0
    %1043 = vmatpush1.bf16.msra.mxu0 0
    %1044 = vmatprep.subr.bf16.mxu0 0
    %1045 = vmatpush1.bf16.msra.mxu0 0
    %1046 = vmatprep.subr.bf16.mxu0 0
    %1047 = vmatpush1.bf16.msra.mxu0 0
    %1048 = vmatprep.subr.bf16.mxu0 0
    %1049 = vmatpush1.bf16.msra.mxu0 0
    %1050 = vmatprep.subr.bf16.mxu0 0
    %1051 = vmatpush1.bf16.msra.mxu0 0
    %1052 = vmatprep.subr.bf16.mxu0 0
    %1053 = vmatpush1.bf16.msra.mxu0 0
    %1054 = vmatprep.subr.bf16.mxu0 0
    %1055 = vmatpush1.bf16.msra.mxu0 0
    %1056 = vmatprep.mubr.bf16.mxu0 0
    %1057 = vmatmul.mubr.bf16.gmra.mrb[0].mxu0 %v1022
    %v1058 = vpop.f32.mrb[0].mxu0
    %v1059 = vadd.f32 0.0, %v1058
    %v1060 = vpop.f32.mrb[0].mxu0
    %v1061 = vpop.f32.mrb[0].mxu0
    %v1062 = vadd.f32 0.0, %v1061
    %v1063 = vpop.f32.mrb[0].mxu0
    %1064 = vdwg.mxu0
    %v1065 = vsub.f32 %v1059, %v66
    %v1066 = vsub.f32 %v1062, %v67
    %1067 = vxpose.xlu0.c.b16.start [1/8] %v219, 128
    %1068 = vxpose.xlu0.c.b16.cont [2/8] %v220, 128
    %1069 = vxpose.xlu0.c.b16.cont [3/8] %v221, 128
    %1070 = vxpose.xlu0.c.b16.cont [4/8] 0, 128
    %1071 = vxpose.xlu0.c.b16.cont [5/8] 0, 128
    %1072 = vxpose.xlu0.c.b16.cont [6/8] 0, 128
    %1073 = vxpose.xlu0.c.b16.cont [7/8] 0, 128
    %1074 = vxpose.xlu0.c.b16.end [8/8] 0, 128
    %v1075 = vpop.trf.xlu0
    %v1076 = vpop.trf.xlu0
    %v1077 = vpop.trf.xlu0
    %v1078 = vpop.trf.xlu0
    %v1079 = vpop.trf.xlu0
    %v1080 = vpop.trf.xlu0
    %v1081 = vpop.trf.xlu0
    %v1082 = vpop.trf.xlu0
    %v1084 = vsel %vm225, %v1075, 0
    %1086 = vmatprep.subr.bf16.mxu0 0
    %1087 = vmatpush1.bf16.msra.mxu0 %v296
    %1088 = vmatprep.subr.bf16.mxu0 0
    %1089 = vmatpush1.bf16.msra.mxu0 %v297
    %1090 = vmatprep.subr.bf16.mxu0 0
    %1091 = vmatpush1.bf16.msra.mxu0 %v298
    %1092 = vmatprep.subr.bf16.mxu0 0
    %1093 = vmatpush1.bf16.msra.mxu0 0
    %1094 = vmatprep.subr.bf16.mxu0 0
    %1095 = vmatpush1.bf16.msra.mxu0 0
    %1096 = vmatprep.subr.bf16.mxu0 0
    %1097 = vmatpush1.bf16.msra.mxu0 0
    %1098 = vmatprep.subr.bf16.mxu0 0
    %1099 = vmatpush1.bf16.msra.mxu0 0
    %1100 = vmatprep.subr.bf16.mxu0 0
    %1101 = vmatpush1.bf16.msra.mxu0 0
    %1102 = vmatprep.subr.bf16.mxu0 0
    %1103 = vmatpush1.bf16.msra.mxu0 0
    %1104 = vmatprep.subr.bf16.mxu0 0
    %1105 = vmatpush1.bf16.msra.mxu0 0
    %1106 = vmatprep.subr.bf16.mxu0 0
    %1107 = vmatpush1.bf16.msra.mxu0 0
    %1108 = vmatprep.subr.bf16.mxu0 0
    %1109 = vmatpush1.bf16.msra.mxu0 0
    %1110 = vmatprep.subr.bf16.mxu0 0
    %1111 = vmatpush1.bf16.msra.mxu0 0
    %1112 = vmatprep.subr.bf16.mxu0 0
    %1113 = vmatpush1.bf16.msra.mxu0 0
    %1114 = vmatprep.subr.bf16.mxu0 0
    %1115 = vmatpush1.bf16.msra.mxu0 0
    %1116 = vmatprep.subr.bf16.mxu0 0
    %1117 = vmatpush1.bf16.msra.mxu0 0
    %1118 = vmatprep.mubr.bf16.mxu0 0
    %1119 = vmatmul.mubr.bf16.gmra.mrb[0].mxu0 %v1084
    %v1120 = vpop.f32.mrb[0].mxu0
    %v1121 = vadd.f32 0.0, %v1120
    %v1122 = vpop.f32.mrb[0].mxu0
    %v1123 = vpop.f32.mrb[0].mxu0
    %v1124 = vadd.f32 0.0, %v1123
    %v1125 = vpop.f32.mrb[0].mxu0
    %1126 = vdwg.mxu0
    %v1127 = vsub.f32 %v1121, %v66
    %v1128 = vsub.f32 %v1124, %v67
    %v1129 = vmul.f32 %v1065, %v1065
    %v1130 = vmul.f32 %v1066, %v1066
    %v1131 = vsel %vm313, %v1129, 0.0
    %v1132 = vsel %vm313, %v1130, 0.0
    %v1133 = vadd.f32 %v1131, %v1132
    %1134 = vadd.xlane.f32.xlu0 %v1133
    %v1135 = vpop.xlane.xlu0 %1134
    %v1136 = vrot.slane %v1135, 4
    %v1137 = vadd.f32 %v1135, %v1136
    %v1138 = vrot.slane %v1137, 2
    %v1139 = vadd.f32 %v1137, %v1138
    %v1140 = vrot.slane %v1139, 1
    %v1141 = vadd.f32 %v1139, %v1140
    %s1142 = vtos %v1141
    %v1143 = vstv %s1142
    %v1144 = vrsqrt.pop %v1143
    %v1145 = vmul.f32 %v1143, %v1144
    %vm1146 = vcmp.eq.f32.partialorder %v1143, inf
    %v1147 = vsel %vm1146, %v1143, %v1145
    %vm1148 = vcmp.eq.f32.partialorder %v1143, 0.0
    %v1149 = vand.u32 %v1143, 2147483648
    %v1150 = vsel %vm1148, %v1149, %v1147
    %s1151 = vtos %v1150
    %v1152 = vmul.f32 %v1127, %v1127
    %v1153 = vmul.f32 %v1128, %v1128
    %v1154 = vsel %vm313, %v1152, 0.0
    %v1155 = vsel %vm313, %v1153, 0.0
    %v1156 = vadd.f32 %v1154, %v1155
    %1157 = vadd.xlane.f32.xlu0 %v1156
    %v1158 = vpop.xlane.xlu0 %1157
    %v1159 = vrot.slane %v1158, 4
    %v1160 = vadd.f32 %v1158, %v1159
    %v1161 = vrot.slane %v1160, 2
    %v1162 = vadd.f32 %v1160, %v1161
    %v1163 = vrot.slane %v1162, 1
    %v1164 = vadd.f32 %v1162, %v1163
    %s1165 = vtos %v1164
    %v1166 = vstv %s1165
    %v1167 = vrsqrt.pop %v1166
    %v1168 = vmul.f32 %v1166, %v1167
    %vm1169 = vcmp.eq.f32.partialorder %v1166, inf
    %v1170 = vsel %vm1169, %v1166, %v1168
    %vm1171 = vcmp.eq.f32.partialorder %v1166, 0.0
    %v1172 = vand.u32 %v1166, 2147483648
    %v1173 = vsel %vm1171, %v1172, %v1170
    %s1174 = vtos %v1173
    %s1175 = sadd.f32 %s1151, %s1174
    %s1176 = smul.f32 %s68, %s1175
    %s1177 = scalar_lea.smem [#allocation5], 1
    %1178 = sst [smem:[%s1177]] %s1176
    %v1179 = vunpack.c.l.bf16 %v38
    %v1180 = vunpack.c.l.bf16 %v39
    %v1181 = vunpack.c.l.bf16 %v40
    %v1182 = vunpack.c.l.bf16 %v41
    %v1183 = vunpack.c.l.bf16 %v42
    %v1184 = vunpack.c.l.bf16 %v43
    %v1185 = vunpack.c.l.bf16 %v44
    %v1186 = vunpack.c.l.bf16 %v45
    %v1187 = vsub.f32 %v361, %v1179
    %v1188 = vsub.f32 %v364, %v1180
    %v1189 = vsub.f32 %v369, %v1181
    %v1190 = vsub.f32 %v372, %v1182
    %v1191 = vsub.f32 %v377, %v1183
    %v1192 = vsub.f32 %v380, %v1184
    %v1193 = vsub.f32 %v385, %v1185
    %v1194 = vsub.f32 %v388, %v1186
    %v1195 = vunpack.c.l.bf16 %v46
    %v1196 = vunpack.c.l.bf16 %v47
    %v1197 = vunpack.c.l.bf16 %v48
    %v1198 = vunpack.c.l.bf16 %v49
    %v1199 = vunpack.c.l.bf16 %v50
    %v1200 = vunpack.c.l.bf16 %v51
    %v1201 = vsub.f32 %v435, %v1195
    %v1202 = vsub.f32 %v438, %v1196
    %v1203 = vsub.f32 %v443, %v1197
    %v1204 = vsub.f32 %v446, %v1198
    %v1205 = vsub.f32 %v451, %v1199
    %v1206 = vsub.f32 %v454, %v1200
    %v1207 = vmul.f32 %v1187, %v1187
    %v1208 = vmul.f32 %v1188, %v1188
    %v1209 = vmul.f32 %v1189, %v1189
    %v1210 = vmul.f32 %v1190, %v1190
    %v1211 = vmul.f32 %v1191, %v1191
    %v1212 = vmul.f32 %v1192, %v1192
    %v1213 = vmul.f32 %v1193, %v1193
    %v1214 = vmul.f32 %v1194, %v1194
    %v1215 = vsel %vm114, %v1207, 0.0
    %v1216 = vsel %vm114, %v1208, 0.0
    %v1217 = vadd.f32 %v1215, %v1216
    %v1218 = vsel %vm114, %v1209, 0.0
    %v1219 = vadd.f32 %v1217, %v1218
    %v1220 = vsel %vm114, %v1210, 0.0
    %v1221 = vadd.f32 %v1219, %v1220
    %v1222 = vsel %vm114, %v1211, 0.0
    %v1223 = vadd.f32 %v1221, %v1222
    %v1224 = vsel %vm114, %v1212, 0.0
    %v1225 = vadd.f32 %v1223, %v1224
    %v1226 = vsel %vm114, %v1213, 0.0
    %v1227 = vadd.f32 %v1225, %v1226
    %v1228 = vsel %vm114, %v1214, 0.0
    %v1229 = vadd.f32 %v1227, %v1228
    %1230 = vadd.xlane.f32.xlu0 %v1229
    %v1231 = vpop.xlane.xlu0 %1230
    %v1232 = vrot.slane %v1231, 4
    %v1233 = vadd.f32 %v1231, %v1232
    %v1234 = vrot.slane %v1233, 2
    %v1235 = vadd.f32 %v1233, %v1234
    %v1236 = vrot.slane %v1235, 1
    %v1237 = vadd.f32 %v1235, %v1236
    %s1238 = vtos %v1237
    %v1239 = vstv %s1238
    %v1240 = vrsqrt.pop %v1239
    %v1241 = vmul.f32 %v1239, %v1240
    %vm1242 = vcmp.eq.f32.partialorder %v1239, inf
    %v1243 = vsel %vm1242, %v1239, %v1241
    %vm1244 = vcmp.eq.f32.partialorder %v1239, 0.0
    %v1245 = vand.u32 %v1239, 2147483648
    %v1246 = vsel %vm1244, %v1245, %v1243
    %s1247 = vtos %v1246
    %v1248 = vmul.f32 %v1201, %v1201
    %v1249 = vmul.f32 %v1202, %v1202
    %v1250 = vmul.f32 %v1203, %v1203
    %v1251 = vmul.f32 %v1204, %v1204
    %v1252 = vmul.f32 %v1205, %v1205
    %v1253 = vmul.f32 %v1206, %v1206
    %v1254 = vsel %vm225, %v1248, 0.0
    %v1255 = vsel %vm225, %v1249, 0.0
    %v1256 = vadd.f32 %v1254, %v1255
    %v1257 = vsel %vm225, %v1250, 0.0
    %v1258 = vadd.f32 %v1256, %v1257
    %v1259 = vsel %vm225, %v1251, 0.0
    %v1260 = vadd.f32 %v1258, %v1259
    %v1261 = vsel %vm225, %v1252, 0.0
    %v1262 = vadd.f32 %v1260, %v1261
    %v1263 = vsel %vm225, %v1253, 0.0
    %v1264 = vadd.f32 %v1262, %v1263
    %1265 = vadd.xlane.f32.xlu0 %v1264
    %v1266 = vpop.xlane.xlu0 %1265
    %v1267 = vrot.slane %v1266, 4
    %v1268 = vadd.f32 %v1266, %v1267
    %v1269 = vrot.slane %v1268, 2
    %v1270 = vadd.f32 %v1268, %v1269
    %v1271 = vrot.slane %v1270, 1
    %v1272 = vadd.f32 %v1270, %v1271
    %s1273 = vtos %v1272
    %v1274 = vstv %s1273
    %v1275 = vrsqrt.pop %v1274
    %v1276 = vmul.f32 %v1274, %v1275
    %vm1277 = vcmp.eq.f32.partialorder %v1274, inf
    %v1278 = vsel %vm1277, %v1274, %v1276
    %vm1279 = vcmp.eq.f32.partialorder %v1274, 0.0
    %v1280 = vand.u32 %v1274, 2147483648
    %v1281 = vsel %vm1279, %v1280, %v1278
    %s1282 = vtos %v1281
    %s1283 = sadd.f32 %s1247, %s1282
    %s1284 = smul.f32 %s69, %s1283
    %s1285 = scalar_lea.smem [#allocation5], 2
    %1286 = sst [smem:[%s1285]] %s1284
    // Predicated region
    $region30: #{tpu_custom_call.1} parent=1 // pred_check
      _
    $region31: #{tpu_custom_call.1} parent=1 // pred_check_branch
      %1288 = sbr.rel (0) target = $region33
    $region32: #{tpu_custom_call.1} parent=1 // pred_region
      %s1290 = ssub.s32 16, 16
      %1291 = vsyncadd [#allocation3], %s1290
      %1294 = dma.smem_to_hbm [#allocation5], 16, %s6, [#allocation3]
    $region33: #{tpu_custom_call.1} parent=1 // pred_fallthru
      _
    // Predicated region
    $region34: #{tpu_custom_call.1} parent=1 // pred_check
      _
    $region35: #{tpu_custom_call.1} parent=1 // pred_check_branch
      %1296 = sbr.rel (0) target = $region37
    $region36: #{tpu_custom_call.1} parent=1 // pred_region
      %1297 = dma.done [#allocation3], 16
    $region37: #{tpu_custom_call.1} parent=1 // pred_fallthru
      _
    %1298 = sfence
    %1299 = vsyncpa [#allocation3], 1
    %1300 = vsyncpa [#allocation4], 1

</llo_original>
